<compile_context>
chip_gen: v7x
topology: tpu7x:2x2x1
jax: 0.10.0
libtpu: 0.0.40
codegen_flags: <defaults>
</compile_context>

<pallas_src>
import functools
import numpy as np

import jax
import jax.numpy as jnp
from jax import lax
from jax.experimental import pallas as pl
from jax.experimental.pallas import tpu as pltpu


# ------------------------------ helpers --------------------------------------

_SQRT_HALF = 0.7071067811865476


def _erf_f32(x):
    # Abramowitz & Stegun 7.1.26 polynomial approximation (|err| < 1.5e-7).
    # Uses only exp/mul/add/select, which lower cleanly in Mosaic.
    a1 = jnp.float32(0.254829592)
    a2 = jnp.float32(-0.284496736)
    a3 = jnp.float32(1.421413741)
    a4 = jnp.float32(-1.453152027)
    a5 = jnp.float32(1.061405429)
    pc = jnp.float32(0.3275911)
    sgn = jnp.where(x >= 0, jnp.float32(1.0), jnp.float32(-1.0))
    ax = jnp.abs(x)
    t = 1.0 / (1.0 + pc * ax)
    poly = ((((a5 * t + a4) * t + a3) * t + a2) * t + a1) * t
    return sgn * (1.0 - poly * jnp.exp(-ax * ax))


def _gelu_exact(x):
    # erf-based GELU, matches torch.nn.GELU() default to ~1e-7
    return 0.5 * x * (1.0 + _erf_f32(x * jnp.float32(_SQRT_HALF)))


def _pick_tile(n, candidates):
    # Never pick tiles < 16 (bf16 sublane packing); fall back to full extent.
    for t in candidates:
        if n % t == 0:
            return t
    return n


def _vmem_limit_bytes():
    # Generation-aware VMEM budget: ~3/4 of physical, capped at 100 MiB.
    cap = 64 * 1024 * 1024  # conservative default (v7x physical VMEM)
    try:
        info = pltpu.get_tpu_info()
        for attr in ("vmem_capacity_bytes", "vmem_bytes", "vmem_size_bytes"):
            val = getattr(info, attr, None)
            if isinstance(val, int) and val > 0:
                cap = val
                break
    except Exception:
        pass
    return int(min(cap * 3 // 4, 100 * 1024 * 1024))


# ------------------------------ kernels ---------------------------------------

def qkv_kernel(x_ref, g1_ref, b1_ref, wqkv_ref, bqkv_ref,
               q_ref, k_ref, v_ref, *, num_heads):
    """LayerNorm1 + fused QKV projection; emits head-major q/k/v (bf16).

    Head split is done ONCE per query tile here, so phase 2 never performs
    lane slicing or concatenation over heads.
    """
    eps = jnp.float32(1e-5)
    x = x_ref[0]                                            # (tq, C) f32
    mu = jnp.mean(x, axis=-1, keepdims=True)
    var = jnp.mean(jnp.square(x - mu), axis=-1, keepdims=True)
    xn = (x - mu) * lax.rsqrt(var + eps) * g1_ref[...] + b1_ref[...]

    # single full-width MXU matmul; 1/sqrt(hd) already folded into the Q slice
    qkv = jnp.dot(xn.astype(jnp.bfloat16), wqkv_ref[...],
                  preferred_element_type=jnp.float32) + bqkv_ref[...]
    qkv = qkv.astype(jnp.bfloat16)                          # (tq, 3C)

    C = x.shape[-1]
    hd = C // num_heads
    for h in range(num_heads):                              # static unroll
        q_ref[0, h] = qkv[:, h * hd:(h + 1) * hd]
        k_ref[0, h] = qkv[:, C + h * hd:C + (h + 1) * hd]
        v_ref[0, h] = qkv[:, 2 * C + h * hd:2 * C + (h + 1) * hd]


def attn_mlp_kernel(x_ref, q_ref, k_ref, v_ref,
                    wproj_ref, bproj_ref, g2_ref, b2_ref,
                    w1_ref, bm1_ref, w2_ref, bm2_ref,
                    o_ref, m_sc, l_sc, acc_sc, *, num_heads):
    """Flash-style (kv-tiled, online-softmax) attention over head-major q/k/v,
    then per-head projection accumulation + residual + LN2 + MLP + residual."""
    kv = pl.program_id(2)

    @pl.when(kv == 0)
    def _():
        m_sc[...] = jnp.full(m_sc.shape, -jnp.inf, m_sc.dtype)
        l_sc[...] = jnp.zeros(l_sc.shape, l_sc.dtype)
        acc_sc[...] = jnp.zeros(acc_sc.shape, acc_sc.dtype)

    q = q_ref[0]                                            # (nh, tq,  hd) bf16 (pre-scaled)
    k = k_ref[0]                                            # (nh, tkv, hd) bf16
    v = v_ref[0]                                            # (nh, tkv, hd) bf16

    # batched-over-heads score matmul, f32 accumulation
    s = jnp.einsum('hqd,hkd->hqk', q, k,
                   preferred_element_type=jnp.float32)      # (nh, tq, tkv)
    m_prev = m_sc[...]
    m_new = jnp.maximum(m_prev, jnp.max(s, axis=-1, keepdims=True))
    alpha = jnp.exp(m_prev - m_new)
    p = jnp.exp(s - m_new)
    l_sc[...] = alpha * l_sc[...] + jnp.sum(p, axis=-1, keepdims=True)
    acc_sc[...] = alpha * acc_sc[...] + jnp.einsum(
        'hqk,hkd->hqd', p.astype(jnp.bfloat16), v,
        preferred_element_type=jnp.float32)
    m_sc[...] = m_new

    @pl.when(kv == pl.num_programs(2) - 1)
    def _():
        eps = jnp.float32(1e-5)
        # Deferred softmax normalisation (approximate EUP reciprocal; ~1e-3
        # relative error, within the test tolerance).
        o = acc_sc[...] * pl.reciprocal(l_sc[...], approx=True)   # (nh, tq, hd) f32

        # Per-head output projection, accumulated -> no lane concat/relayout.
        tq = o.shape[1]
        C = x_ref.shape[-1]
        y = jnp.zeros((tq, C), jnp.float32)
        for h in range(num_heads):                          # static unroll
            y = y + jnp.dot(o[h].astype(jnp.bfloat16), wproj_ref[h],
                            preferred_element_type=jnp.float32)
        y = y + bproj_ref[...]

        x1 = x_ref[0] + y                                   # first residual

        mu2 = jnp.mean(x1, axis=-1, keepdims=True)
        var2 = jnp.mean(jnp.square(x1 - mu2), axis=-1, keepdims=True)
        x2n = (x1 - mu2) * lax.rsqrt(var2 + eps) * g2_ref[...] + b2_ref[...]

        h1 = jnp.dot(x2n.astype(jnp.bfloat16), w1_ref[...],
                     preferred_element_type=jnp.float32) + bm1_ref[...]
        h1 = _gelu_exact(h1)
        h2 = jnp.dot(h1.astype(jnp.bfloat16), w2_ref[...],
                     preferred_element_type=jnp.float32) + bm2_ref[...]
        o_ref[0] = x1 + h2                                  # second residual


# ------------------------------ wrapper ----------------------------------------

def prepare_params(p, *, num_heads):
    """One-time parameter prep: fold 1/sqrt(hd) into the Q projection columns,
    cast matmul weights to bf16, and reshape the output projection head-major."""
    C = p["wproj"].shape[0]
    hd = C // num_heads
    scale = jnp.float32(hd ** -0.5)
    qmask = jnp.concatenate([jnp.full((C,), scale, jnp.float32),
                             jnp.ones((2 * C,), jnp.float32)])
    return {
        "g1": p["g1"].astype(jnp.float32),
        "b1": p["b1"].astype(jnp.float32),
        "wqkv": (p["wqkv"].astype(jnp.float32) * qmask[None, :]).astype(jnp.bfloat16),
        "bqkv": p["bqkv"].astype(jnp.float32) * qmask[None, :],
        # head-major output projection weights: (nh, hd, C)
        "wproj": p["wproj"].astype(jnp.bfloat16).reshape(num_heads, hd, C),
        "bproj": p["bproj"].astype(jnp.float32),
        "g2": p["g2"].astype(jnp.float32),
        "b2": p["b2"].astype(jnp.float32),
        "w1": p["w1"].astype(jnp.bfloat16),
        "bm1": p["bm1"].astype(jnp.float32),
        "w2": p["w2"].astype(jnp.bfloat16),
        "bm2": p["bm2"].astype(jnp.float32),
    }


def _forward_impl(x, pp, *, num_heads, single_buffer_consts):
    B, H, W, C = x.shape
    N = H * W
    assert C % num_heads == 0
    hd = C // num_heads
    mlp_dim = pp["w1"].shape[1]

    tq = _pick_tile(N, (256, 128, 64, 32, 16))
    tkv = _pick_tile(N, (512, 256, 128, 64, 32, 16))
    ntq, ntkv = N // tq, N // tkv

    xf = x.reshape(B, N, C)
    if xf.dtype != jnp.float32:
        xf = xf.astype(jnp.float32)

    vmem_limit = _vmem_limit_bytes()
    const_mode = {"pipeline_mode": pl.Buffered(1)} if single_buffer_consts else {}

    def const_spec(shape, ngrid):
        # constant-index (fetched once) weight/bias block
        zeros = (0,) * len(shape)
        imap = (lambda b, i: zeros) if ngrid == 2 else (lambda b, i, kv: zeros)
        return pl.BlockSpec(shape, imap, **const_mode)

    # ---- phase 1: LN1 + fused QKV projection -> head-major q/k/v ----
    cparams1 = pltpu.CompilerParams(
        dimension_semantics=("parallel", "parallel"),
        vmem_limit_bytes=vmem_limit)
    cost1 = pl.CostEstimate(
        flops=2 * B * N * C * 3 * C,
        transcendentals=B * N,
        bytes_accessed=4 * B * N * C + 2 * C * 3 * C + 3 * 2 * B * N * C)

    x_tile1 = pl.BlockSpec((1, tq, C), lambda b, i: (b, i, 0))
    head_tile_out = pl.BlockSpec((1, num_heads, tq, hd), lambda b, i: (b, 0, i, 0))

    q, k, v = pl.pallas_call(
        functools.partial(qkv_kernel, num_heads=num_heads),
        out_shape=(jax.ShapeDtypeStruct((B, num_heads, N, hd), jnp.bfloat16),) * 3,
        grid=(B, ntq),
        in_specs=[
            x_tile1,                                         # x tile
            const_spec((1, C), 2), const_spec((1, C), 2),    # ln1 gamma/beta
            const_spec((C, 3 * C), 2), const_spec((1, 3 * C), 2),  # fused qkv W / b
        ],
        out_specs=(head_tile_out,) * 3,
        compiler_params=cparams1,
        cost_estimate=cost1,
    )(xf, pp["g1"], pp["b1"], pp["wqkv"], pp["bqkv"])

    # ---- phase 2: flash attention + proj + residual + LN2 + MLP + residual ----
    cparams2 = pltpu.CompilerParams(
        dimension_semantics=("parallel", "parallel", "arbitrary"),
        vmem_limit_bytes=vmem_limit)
    cost2 = pl.CostEstimate(
        flops=4 * B * num_heads * N * N * hd + 2 * B * N * C * C
              + 4 * B * N * C * mlp_dim,
        transcendentals=B * num_heads * N * N + B * N * mlp_dim,
        bytes_accessed=8 * B * N * C + 3 * 2 * B * N * C
                       + 2 * (C * C + 2 * C * mlp_dim))

    x_tile = pl.BlockSpec((1, tq, C), lambda b, i, kv: (b, i, 0))
    q_tile = pl.BlockSpec((1, num_heads, tq, hd), lambda b, i, kv: (b, 0, i, 0))
    kv_tile = pl.BlockSpec((1, num_heads, tkv, hd), lambda b, i, kv: (b, 0, kv, 0))
    out_tile = pl.BlockSpec((1, tq, C), lambda b, i, kv: (b, i, 0))

    out = pl.pallas_call(
        functools.partial(attn_mlp_kernel, num_heads=num_heads),
        out_shape=jax.ShapeDtypeStruct((B, N, C), jnp.float32),
        grid=(B, ntq, ntkv),
        in_specs=[
            x_tile,                                          # residual shortcut
            q_tile, kv_tile, kv_tile,                        # q / k / v (head-major)
            const_spec((num_heads, hd, C), 3), const_spec((1, C), 3),  # proj W / b
            const_spec((1, C), 3), const_spec((1, C), 3),              # ln2 gamma/beta
            const_spec((C, mlp_dim), 3), const_spec((1, mlp_dim), 3),  # mlp lin1
            const_spec((mlp_dim, C), 3), const_spec((1, C), 3),        # mlp lin2
        ],
        out_specs=out_tile,
        scratch_shapes=[
            pltpu.VMEM((num_heads, tq, 1), jnp.float32),     # running max m
            pltpu.VMEM((num_heads, tq, 1), jnp.float32),     # running sum l
            pltpu.VMEM((num_heads, tq, hd), jnp.float32),    # running PV acc
        ],
        compiler_params=cparams2,
        cost_estimate=cost2,
    )(xf, q, k, v, pp["wproj"], pp["bproj"], pp["g2"], pp["b2"],
      pp["w1"], pp["bm1"], pp["w2"], pp["bm2"])

    return out.reshape(B, H, W, C)


def block_forward(x, pp, *, num_heads):
    try:
        out = _forward_impl(x, pp, num_heads=num_heads, single_buffer_consts=True)
        jax.block_until_ready(out)
        return out
    except Exception:
        # Fallback if this JAX build rejects pl.Buffered(1) single-buffering.
        return _forward_impl(x, pp, num_heads=num_heads, single_buffer_consts=False)


# ------------------------------ plain-JAX reference ----------------------------

def block_reference(x, p, *, num_heads):
    B, H, W, C = x.shape
    N = H * W
    hd = C // num_heads
    scale = hd ** -0.5

    def ln(z, g, b):
        mu = z.mean(-1, keepdims=True)
        var = jnp.square(z - mu).mean(-1, keepdims=True)
        return (z - mu) / jnp.sqrt(var + 1e-5) * g + b

    xf = x.reshape(B, N, C).astype(jnp.float32)
    shortcut = xf
    xn = ln(xf, p["g1"], p["b1"])
    qkv = xn @ p["wqkv"] + p["bqkv"]                       # (B, N, 3C)
    qkv = qkv.reshape(B, N, 3, num_heads, hd).transpose(2, 0, 3, 1, 4)
    q, k, v = qkv[0], qkv[1], qkv[2]                       # (B, nh, N, hd)
    attn = (q * scale) @ jnp.swapaxes(k, -2, -1)
    attn = jax.nn.softmax(attn, axis=-1)
    o = (attn @ v).transpose(0, 2, 1, 3).reshape(B, N, C)
    y = o @ p["wproj"] + p["bproj"]
    x1 = shortcut + y
    x2n = ln(x1, p["g2"], p["b2"])
    h1 = x2n @ p["w1"] + p["bm1"]
    h1 = 0.5 * h1 * (1.0 + lax.erf(h1 * _SQRT_HALF))       # exact torch GELU
    out = x1 + (h1 @ p["w2"] + p["bm2"])
    return out.reshape(B, H, W, C)


# ------------------------------ main --------------------------------------------

if __name__ == "__main__":
    key = jax.random.PRNGKey(0)
    B, H, W, C = 2, 8, 8, 32
    num_heads = 4
    mlp_ratio = 4.0
    mlp_dim = int(C * mlp_ratio)

    keys = jax.random.split(key, 10)
    p = {
        "g1": jnp.ones((1, C), jnp.float32),
        "b1": jnp.zeros((1, C), jnp.float32),
        "wqkv": 0.05 * jax.random.normal(keys[0], (C, 3 * C), jnp.float32),
        "bqkv": 0.05 * jax.random.normal(keys[1], (1, 3 * C), jnp.float32),
        "wproj": 0.05 * jax.random.normal(keys[2], (C, C), jnp.float32),
        "bproj": 0.05 * jax.random.normal(keys[3], (1, C), jnp.float32),
        "g2": jnp.ones((1, C), jnp.float32),
        "b2": jnp.zeros((1, C), jnp.float32),
        "w1": 0.05 * jax.random.normal(keys[4], (C, mlp_dim), jnp.float32),
        "bm1": 0.05 * jax.random.normal(keys[5], (1, mlp_dim), jnp.float32),
        "w2": 0.05 * jax.random.normal(keys[6], (mlp_dim, C), jnp.float32),
        "bm2": 0.05 * jax.random.normal(keys[7], (1, C), jnp.float32),
    }
    x = jax.random.normal(keys[8], (B, H, W, C), jnp.float32)

    pp = prepare_params(p, num_heads=num_heads)            # one-time prep
    out = jax.block_until_ready(block_forward(x, pp, num_heads=num_heads))
    ref = block_reference(x, p, num_heads=num_heads)

    np.testing.assert_allclose(np.asarray(out), np.asarray(ref),
                               rtol=2e-2, atol=2e-2)
    print("KERNEL_OK")
</pallas_src>

<mosaic_0001>
module attributes {stable_mosaic.version = 11 : i64} {
  func.func @qkv_kernel(%arg0: i32, %arg1: i32, %arg2: memref<1x64x32xf32, #tpu.memory_space<vmem>>, %arg3: memref<1x32xf32, #tpu.memory_space<vmem>>, %arg4: memref<1x32xf32, #tpu.memory_space<vmem>>, %arg5: memref<32x96xbf16, #tpu.memory_space<vmem>>, %arg6: memref<1x96xf32, #tpu.memory_space<vmem>>, %arg7: memref<1x4x64x8xbf16, #tpu.memory_space<vmem>>, %arg8: memref<1x4x64x8xbf16, #tpu.memory_space<vmem>>, %arg9: memref<1x4x64x8xbf16, #tpu.memory_space<vmem>>) attributes {dimension_semantics = [#tpu.dimension_semantics<parallel>, #tpu.dimension_semantics<parallel>], iteration_bounds = array<i64: 2, 1>, scalar_prefetch = 0 : i64, scratch_operands = 0 : i64, tpu.core_type = #tpu.core_type<tc>, window_params = [{transform_indices = @transform_0, window_bounds = array<i64: 1, 64, 32>}, {pipeline_mode = #tpu.pipeline_mode<synchronous>, transform_indices = @transform_1, window_bounds = array<i64: 1, 32>}, {pipeline_mode = #tpu.pipeline_mode<synchronous>, transform_indices = @transform_2, window_bounds = array<i64: 1, 32>}, {pipeline_mode = #tpu.pipeline_mode<synchronous>, transform_indices = @transform_3, window_bounds = array<i64: 32, 96>}, {pipeline_mode = #tpu.pipeline_mode<synchronous>, transform_indices = @transform_4, window_bounds = array<i64: 1, 96>}, {transform_indices = @transform_5, window_bounds = array<i64: 1, 4, 64, 8>}, {transform_indices = @transform_6, window_bounds = array<i64: 1, 4, 64, 8>}, {transform_indices = @transform_7, window_bounds = array<i64: 1, 4, 64, 8>}]} {
    %c0 = arith.constant 0 : index
    %c0_0 = arith.constant 0 : index
    %c0_1 = arith.constant 0 : index
    %0 = vector.load %arg2[%c0, %c0_0, %c0_1] : memref<1x64x32xf32, #tpu.memory_space<vmem>>, vector<1x64x32xf32>
    %1 = vector.shape_cast %0 : vector<1x64x32xf32> to vector<64x32xf32>
    %cst = arith.constant dense<0.000000e+00> : vector<64xf32>
    %2 = vector.multi_reduction <add>, %1, %cst [1] : vector<64x32xf32> to vector<64xf32>
    %3 = vector.shape_cast %2 : vector<64xf32> to vector<64x1xf32>
    %cst_2 = arith.constant 3.200000e+01 : f32
    %4 = vector.broadcast %cst_2 : f32 to vector<64x1xf32>
    %5 = arith.divf %3, %4 : vector<64x1xf32>
    %6 = vector.broadcast %5 : vector<64x1xf32> to vector<64x32xf32>
    %7 = arith.subf %1, %6 : vector<64x32xf32>
    %8 = arith.mulf %7, %7 : vector<64x32xf32>
    %cst_3 = arith.constant dense<0.000000e+00> : vector<64xf32>
    %9 = vector.multi_reduction <add>, %8, %cst_3 [1] : vector<64x32xf32> to vector<64xf32>
    %10 = vector.shape_cast %9 : vector<64xf32> to vector<64x1xf32>
    %cst_4 = arith.constant 3.200000e+01 : f32
    %11 = vector.broadcast %cst_4 : f32 to vector<64x1xf32>
    %12 = arith.divf %10, %11 : vector<64x1xf32>
    %13 = vector.broadcast %5 : vector<64x1xf32> to vector<64x32xf32>
    %14 = arith.subf %1, %13 : vector<64x32xf32>
    %cst_5 = arith.constant 9.99999974E-6 : f32
    %15 = vector.broadcast %cst_5 : f32 to vector<64x1xf32>
    %16 = arith.addf %12, %15 : vector<64x1xf32>
    %17 = math.rsqrt %16 : vector<64x1xf32>
    %18 = vector.broadcast %17 : vector<64x1xf32> to vector<64x32xf32>
    %19 = arith.mulf %14, %18 : vector<64x32xf32>
    %c0_6 = arith.constant 0 : index
    %c0_7 = arith.constant 0 : index
    %20 = vector.load %arg3[%c0_6, %c0_7] : memref<1x32xf32, #tpu.memory_space<vmem>>, vector<1x32xf32>
    %21 = vector.broadcast %20 : vector<1x32xf32> to vector<64x32xf32>
    %22 = arith.mulf %19, %21 : vector<64x32xf32>
    %c0_8 = arith.constant 0 : index
    %c0_9 = arith.constant 0 : index
    %23 = vector.load %arg4[%c0_8, %c0_9] : memref<1x32xf32, #tpu.memory_space<vmem>>, vector<1x32xf32>
    %24 = vector.broadcast %23 : vector<1x32xf32> to vector<64x32xf32>
    %25 = arith.addf %22, %24 : vector<64x32xf32>
    %26 = arith.truncf %25 : vector<64x32xf32> to vector<64x32xbf16>
    %c0_10 = arith.constant 0 : index
    %c0_11 = arith.constant 0 : index
    %27 = vector.load %arg5[%c0_10, %c0_11] : memref<32x96xbf16, #tpu.memory_space<vmem>>, vector<32x96xbf16>
    %cst_12 = arith.constant dense<0.000000e+00> : vector<64x96xf32>
    %28 = tpu.matmul %26, %27, %cst_12 {dimension_numbers = #tpu.dot_dimension_numbers<[1], [0], [0], [1], [0, 0, 1, 1], [], []>} : vector<64x32xbf16>, vector<32x96xbf16>, vector<64x96xf32> -> vector<64x96xf32>
    %c0_13 = arith.constant 0 : index
    %c0_14 = arith.constant 0 : index
    %29 = vector.load %arg6[%c0_13, %c0_14] : memref<1x96xf32, #tpu.memory_space<vmem>>, vector<1x96xf32>
    %30 = vector.broadcast %29 : vector<1x96xf32> to vector<64x96xf32>
    %31 = arith.addf %28, %30 : vector<64x96xf32>
    %32 = arith.truncf %31 : vector<64x96xf32> to vector<64x96xbf16>
    %33 = vector.extract_strided_slice %32 {offsets = [0, 0], sizes = [64, 8], strides = [1, 1]} : vector<64x96xbf16> to vector<64x8xbf16>
    %c0_15 = arith.constant 0 : index
    %c0_16 = arith.constant 0 : index
    %c0_17 = arith.constant 0 : index
    %c0_18 = arith.constant 0 : index
    %34 = vector.load %arg7[%c0_15, %c0_16, %c0_17, %c0_18] : memref<1x4x64x8xbf16, #tpu.memory_space<vmem>>, vector<1x1x64x8xbf16>
    %35 = vector.shape_cast %34 : vector<1x1x64x8xbf16> to vector<64x8xbf16>
    %36 = vector.shape_cast %33 : vector<64x8xbf16> to vector<1x1x64x8xbf16>
    tpu.vector_store %arg7[%c0_15, %c0_16, %c0_17, %c0_18], %36 {strides = array<i32>} : memref<1x4x64x8xbf16, #tpu.memory_space<vmem>>, vector<1x1x64x8xbf16>,
    %37 = vector.extract_strided_slice %32 {offsets = [0, 32], sizes = [64, 8], strides = [1, 1]} : vector<64x96xbf16> to vector<64x8xbf16>
    %c0_19 = arith.constant 0 : index
    %c0_20 = arith.constant 0 : index
    %c0_21 = arith.constant 0 : index
    %c0_22 = arith.constant 0 : index
    %38 = vector.load %arg8[%c0_19, %c0_20, %c0_21, %c0_22] : memref<1x4x64x8xbf16, #tpu.memory_space<vmem>>, vector<1x1x64x8xbf16>
    %39 = vector.shape_cast %38 : vector<1x1x64x8xbf16> to vector<64x8xbf16>
    %40 = vector.shape_cast %37 : vector<64x8xbf16> to vector<1x1x64x8xbf16>
    tpu.vector_store %arg8[%c0_19, %c0_20, %c0_21, %c0_22], %40 {strides = array<i32>} : memref<1x4x64x8xbf16, #tpu.memory_space<vmem>>, vector<1x1x64x8xbf16>,
    %41 = vector.extract_strided_slice %32 {offsets = [0, 64], sizes = [64, 8], strides = [1, 1]} : vector<64x96xbf16> to vector<64x8xbf16>
    %c0_23 = arith.constant 0 : index
    %c0_24 = arith.constant 0 : index
    %c0_25 = arith.constant 0 : index
    %c0_26 = arith.constant 0 : index
    %42 = vector.load %arg9[%c0_23, %c0_24, %c0_25, %c0_26] : memref<1x4x64x8xbf16, #tpu.memory_space<vmem>>, vector<1x1x64x8xbf16>
    %43 = vector.shape_cast %42 : vector<1x1x64x8xbf16> to vector<64x8xbf16>
    %44 = vector.shape_cast %41 : vector<64x8xbf16> to vector<1x1x64x8xbf16>
    tpu.vector_store %arg9[%c0_23, %c0_24, %c0_25, %c0_26], %44 {strides = array<i32>} : memref<1x4x64x8xbf16, #tpu.memory_space<vmem>>, vector<1x1x64x8xbf16>,
    %45 = vector.extract_strided_slice %32 {offsets = [0, 8], sizes = [64, 8], strides = [1, 1]} : vector<64x96xbf16> to vector<64x8xbf16>
    %c0_27 = arith.constant 0 : index
    %c1 = arith.constant 1 : index
    %c0_28 = arith.constant 0 : index
    %c0_29 = arith.constant 0 : index
    %46 = vector.load %arg7[%c0_27, %c1, %c0_28, %c0_29] : memref<1x4x64x8xbf16, #tpu.memory_space<vmem>>, vector<1x1x64x8xbf16>
    %47 = vector.shape_cast %46 : vector<1x1x64x8xbf16> to vector<64x8xbf16>
    %48 = vector.shape_cast %45 : vector<64x8xbf16> to vector<1x1x64x8xbf16>
    tpu.vector_store %arg7[%c0_27, %c1, %c0_28, %c0_29], %48 {strides = array<i32>} : memref<1x4x64x8xbf16, #tpu.memory_space<vmem>>, vector<1x1x64x8xbf16>,
    %49 = vector.extract_strided_slice %32 {offsets = [0, 40], sizes = [64, 8], strides = [1, 1]} : vector<64x96xbf16> to vector<64x8xbf16>
    %c0_30 = arith.constant 0 : index
    %c1_31 = arith.constant 1 : index
    %c0_32 = arith.constant 0 : index
    %c0_33 = arith.constant 0 : index
    %50 = vector.load %arg8[%c0_30, %c1_31, %c0_32, %c0_33] : memref<1x4x64x8xbf16, #tpu.memory_space<vmem>>, vector<1x1x64x8xbf16>
    %51 = vector.shape_cast %50 : vector<1x1x64x8xbf16> to vector<64x8xbf16>
    %52 = vector.shape_cast %49 : vector<64x8xbf16> to vector<1x1x64x8xbf16>
    tpu.vector_store %arg8[%c0_30, %c1_31, %c0_32, %c0_33], %52 {strides = array<i32>} : memref<1x4x64x8xbf16, #tpu.memory_space<vmem>>, vector<1x1x64x8xbf16>,
    %53 = vector.extract_strided_slice %32 {offsets = [0, 72], sizes = [64, 8], strides = [1, 1]} : vector<64x96xbf16> to vector<64x8xbf16>
    %c0_34 = arith.constant 0 : index
    %c1_35 = arith.constant 1 : index
    %c0_36 = arith.constant 0 : index
    %c0_37 = arith.constant 0 : index
    %54 = vector.load %arg9[%c0_34, %c1_35, %c0_36, %c0_37] : memref<1x4x64x8xbf16, #tpu.memory_space<vmem>>, vector<1x1x64x8xbf16>
    %55 = vector.shape_cast %54 : vector<1x1x64x8xbf16> to vector<64x8xbf16>
    %56 = vector.shape_cast %53 : vector<64x8xbf16> to vector<1x1x64x8xbf16>
    tpu.vector_store %arg9[%c0_34, %c1_35, %c0_36, %c0_37], %56 {strides = array<i32>} : memref<1x4x64x8xbf16, #tpu.memory_space<vmem>>, vector<1x1x64x8xbf16>,
    %57 = vector.extract_strided_slice %32 {offsets = [0, 16], sizes = [64, 8], strides = [1, 1]} : vector<64x96xbf16> to vector<64x8xbf16>
    %c0_38 = arith.constant 0 : index
    %c2 = arith.constant 2 : index
    %c0_39 = arith.constant 0 : index
    %c0_40 = arith.constant 0 : index
    %58 = vector.load %arg7[%c0_38, %c2, %c0_39, %c0_40] : memref<1x4x64x8xbf16, #tpu.memory_space<vmem>>, vector<1x1x64x8xbf16>
    %59 = vector.shape_cast %58 : vector<1x1x64x8xbf16> to vector<64x8xbf16>
    %60 = vector.shape_cast %57 : vector<64x8xbf16> to vector<1x1x64x8xbf16>
    tpu.vector_store %arg7[%c0_38, %c2, %c0_39, %c0_40], %60 {strides = array<i32>} : memref<1x4x64x8xbf16, #tpu.memory_space<vmem>>, vector<1x1x64x8xbf16>,
    %61 = vector.extract_strided_slice %32 {offsets = [0, 48], sizes = [64, 8], strides = [1, 1]} : vector<64x96xbf16> to vector<64x8xbf16>
    %c0_41 = arith.constant 0 : index
    %c2_42 = arith.constant 2 : index
    %c0_43 = arith.constant 0 : index
    %c0_44 = arith.constant 0 : index
    %62 = vector.load %arg8[%c0_41, %c2_42, %c0_43, %c0_44] : memref<1x4x64x8xbf16, #tpu.memory_space<vmem>>, vector<1x1x64x8xbf16>
    %63 = vector.shape_cast %62 : vector<1x1x64x8xbf16> to vector<64x8xbf16>
    %64 = vector.shape_cast %61 : vector<64x8xbf16> to vector<1x1x64x8xbf16>
    tpu.vector_store %arg8[%c0_41, %c2_42, %c0_43, %c0_44], %64 {strides = array<i32>} : memref<1x4x64x8xbf16, #tpu.memory_space<vmem>>, vector<1x1x64x8xbf16>,
    %65 = vector.extract_strided_slice %32 {offsets = [0, 80], sizes = [64, 8], strides = [1, 1]} : vector<64x96xbf16> to vector<64x8xbf16>
    %c0_45 = arith.constant 0 : index
    %c2_46 = arith.constant 2 : index
    %c0_47 = arith.constant 0 : index
    %c0_48 = arith.constant 0 : index
    %66 = vector.load %arg9[%c0_45, %c2_46, %c0_47, %c0_48] : memref<1x4x64x8xbf16, #tpu.memory_space<vmem>>, vector<1x1x64x8xbf16>
    %67 = vector.shape_cast %66 : vector<1x1x64x8xbf16> to vector<64x8xbf16>
    %68 = vector.shape_cast %65 : vector<64x8xbf16> to vector<1x1x64x8xbf16>
    tpu.vector_store %arg9[%c0_45, %c2_46, %c0_47, %c0_48], %68 {strides = array<i32>} : memref<1x4x64x8xbf16, #tpu.memory_space<vmem>>, vector<1x1x64x8xbf16>,
    %69 = vector.extract_strided_slice %32 {offsets = [0, 24], sizes = [64, 8], strides = [1, 1]} : vector<64x96xbf16> to vector<64x8xbf16>
    %c0_49 = arith.constant 0 : index
    %c3 = arith.constant 3 : index
    %c0_50 = arith.constant 0 : index
    %c0_51 = arith.constant 0 : index
    %70 = vector.load %arg7[%c0_49, %c3, %c0_50, %c0_51] : memref<1x4x64x8xbf16, #tpu.memory_space<vmem>>, vector<1x1x64x8xbf16>
    %71 = vector.shape_cast %70 : vector<1x1x64x8xbf16> to vector<64x8xbf16>
    %72 = vector.shape_cast %69 : vector<64x8xbf16> to vector<1x1x64x8xbf16>
    tpu.vector_store %arg7[%c0_49, %c3, %c0_50, %c0_51], %72 {strides = array<i32>} : memref<1x4x64x8xbf16, #tpu.memory_space<vmem>>, vector<1x1x64x8xbf16>,
    %73 = vector.extract_strided_slice %32 {offsets = [0, 56], sizes = [64, 8], strides = [1, 1]} : vector<64x96xbf16> to vector<64x8xbf16>
    %c0_52 = arith.constant 0 : index
    %c3_53 = arith.constant 3 : index
    %c0_54 = arith.constant 0 : index
    %c0_55 = arith.constant 0 : index
    %74 = vector.load %arg8[%c0_52, %c3_53, %c0_54, %c0_55] : memref<1x4x64x8xbf16, #tpu.memory_space<vmem>>, vector<1x1x64x8xbf16>
    %75 = vector.shape_cast %74 : vector<1x1x64x8xbf16> to vector<64x8xbf16>
    %76 = vector.shape_cast %73 : vector<64x8xbf16> to vector<1x1x64x8xbf16>
    tpu.vector_store %arg8[%c0_52, %c3_53, %c0_54, %c0_55], %76 {strides = array<i32>} : memref<1x4x64x8xbf16, #tpu.memory_space<vmem>>, vector<1x1x64x8xbf16>,
    %77 = vector.extract_strided_slice %32 {offsets = [0, 88], sizes = [64, 8], strides = [1, 1]} : vector<64x96xbf16> to vector<64x8xbf16>
    %c0_56 = arith.constant 0 : index
    %c3_57 = arith.constant 3 : index
    %c0_58 = arith.constant 0 : index
    %c0_59 = arith.constant 0 : index
    %78 = vector.load %arg9[%c0_56, %c3_57, %c0_58, %c0_59] : memref<1x4x64x8xbf16, #tpu.memory_space<vmem>>, vector<1x1x64x8xbf16>
    %79 = vector.shape_cast %78 : vector<1x1x64x8xbf16> to vector<64x8xbf16>
    %80 = vector.shape_cast %77 : vector<64x8xbf16> to vector<1x1x64x8xbf16>
    tpu.vector_store %arg9[%c0_56, %c3_57, %c0_58, %c0_59], %80 {strides = array<i32>} : memref<1x4x64x8xbf16, #tpu.memory_space<vmem>>, vector<1x1x64x8xbf16>,
    return
  }
  func.func @transform_0(%arg0: i32, %arg1: i32) -> (i32, i32, i32) {
    %c0_i32 = arith.constant 0 : i32
    %c0_i32_0 = arith.constant 0 : i32
    return %arg0, %arg1, %c0_i32 : i32, i32, i32
  }
  func.func @transform_1(%arg0: i32, %arg1: i32) -> (i32, i32) {
    %c0_i32 = arith.constant 0 : i32
    %c0_i32_0 = arith.constant 0 : i32
    %c0_i32_1 = arith.constant 0 : i32
    return %c0_i32, %c0_i32_0 : i32, i32
  }
  func.func @transform_2(%arg0: i32, %arg1: i32) -> (i32, i32) {
    %c0_i32 = arith.constant 0 : i32
    %c0_i32_0 = arith.constant 0 : i32
    %c0_i32_1 = arith.constant 0 : i32
    return %c0_i32, %c0_i32_0 : i32, i32
  }
  func.func @transform_3(%arg0: i32, %arg1: i32) -> (i32, i32) {
    %c0_i32 = arith.constant 0 : i32
    %c0_i32_0 = arith.constant 0 : i32
    %c0_i32_1 = arith.constant 0 : i32
    return %c0_i32, %c0_i32_0 : i32, i32
  }
  func.func @transform_4(%arg0: i32, %arg1: i32) -> (i32, i32) {
    %c0_i32 = arith.constant 0 : i32
    %c0_i32_0 = arith.constant 0 : i32
    %c0_i32_1 = arith.constant 0 : i32
    return %c0_i32, %c0_i32_0 : i32, i32
  }
  func.func @transform_5(%arg0: i32, %arg1: i32) -> (i32, i32, i32, i32) {
    %c0_i32 = arith.constant 0 : i32
    %c0_i32_0 = arith.constant 0 : i32
    %c0_i32_1 = arith.constant 0 : i32
    return %arg0, %c0_i32, %arg1, %c0_i32_0 : i32, i32, i32, i32
  }
  func.func @transform_6(%arg0: i32, %arg1: i32) -> (i32, i32, i32, i32) {
    %c0_i32 = arith.constant 0 : i32
    %c0_i32_0 = arith.constant 0 : i32
    %c0_i32_1 = arith.constant 0 : i32
    return %arg0, %c0_i32, %arg1, %c0_i32_0 : i32, i32, i32, i32
  }
  func.func @transform_7(%arg0: i32, %arg1: i32) -> (i32, i32, i32, i32) {
    %c0_i32 = arith.constant 0 : i32
    %c0_i32_0 = arith.constant 0 : i32
    %c0_i32_1 = arith.constant 0 : i32
    return %arg0, %c0_i32, %arg1, %c0_i32_0 : i32, i32, i32, i32
  }
}

module attributes {stable_mosaic.version = 11 : i64} {
  func.func @qkv_kernel(%arg0: i32, %arg1: i32, %arg2: memref<1x64x32xf32, #tpu.memory_space<vmem>>, %arg3: memref<1x32xf32, #tpu.memory_space<vmem>>, %arg4: memref<1x32xf32, #tpu.memory_space<vmem>>, %arg5: memref<32x96xbf16, #tpu.memory_space<vmem>>, %arg6: memref<1x96xf32, #tpu.memory_space<vmem>>, %arg7: memref<1x4x64x8xbf16, #tpu.memory_space<vmem>>, %arg8: memref<1x4x64x8xbf16, #tpu.memory_space<vmem>>, %arg9: memref<1x4x64x8xbf16, #tpu.memory_space<vmem>>) attributes {dimension_semantics = [#tpu.dimension_semantics<parallel>, #tpu.dimension_semantics<parallel>], iteration_bounds = array<i64: 2, 1>, scalar_prefetch = 0 : i64, scratch_operands = 0 : i64, tpu.core_type = #tpu.core_type<tc>, window_params = [{transform_indices = @transform_0, window_bounds = array<i64: 1, 64, 32>}, {pipeline_mode = #tpu.pipeline_mode<synchronous>, transform_indices = @transform_1, window_bounds = array<i64: 1, 32>}, {pipeline_mode = #tpu.pipeline_mode<synchronous>, transform_indices = @transform_2, window_bounds = array<i64: 1, 32>}, {pipeline_mode = #tpu.pipeline_mode<synchronous>, transform_indices = @transform_3, window_bounds = array<i64: 32, 96>}, {pipeline_mode = #tpu.pipeline_mode<synchronous>, transform_indices = @transform_4, window_bounds = array<i64: 1, 96>}, {transform_indices = @transform_5, window_bounds = array<i64: 1, 4, 64, 8>}, {transform_indices = @transform_6, window_bounds = array<i64: 1, 4, 64, 8>}, {transform_indices = @transform_7, window_bounds = array<i64: 1, 4, 64, 8>}]} {
    %c0 = arith.constant 0 : index
    %c0_0 = arith.constant 0 : index
    %c0_1 = arith.constant 0 : index
    %0 = vector.load %arg2[%c0, %c0_0, %c0_1] : memref<1x64x32xf32, #tpu.memory_space<vmem>>, vector<1x64x32xf32>
    %1 = vector.shape_cast %0 : vector<1x64x32xf32> to vector<64x32xf32>
    %cst = arith.constant dense<0.000000e+00> : vector<64xf32>
    %2 = vector.multi_reduction <add>, %1, %cst [1] : vector<64x32xf32> to vector<64xf32>
    %3 = vector.shape_cast %2 : vector<64xf32> to vector<64x1xf32>
    %cst_2 = arith.constant 3.200000e+01 : f32
    %4 = vector.broadcast %cst_2 : f32 to vector<64x1xf32>
    %5 = arith.divf %3, %4 : vector<64x1xf32>
    %6 = vector.broadcast %5 : vector<64x1xf32> to vector<64x32xf32>
    %7 = arith.subf %1, %6 : vector<64x32xf32>
    %8 = arith.mulf %7, %7 : vector<64x32xf32>
    %cst_3 = arith.constant dense<0.000000e+00> : vector<64xf32>
    %9 = vector.multi_reduction <add>, %8, %cst_3 [1] : vector<64x32xf32> to vector<64xf32>
    %10 = vector.shape_cast %9 : vector<64xf32> to vector<64x1xf32>
    %cst_4 = arith.constant 3.200000e+01 : f32
    %11 = vector.broadcast %cst_4 : f32 to vector<64x1xf32>
    %12 = arith.divf %10, %11 : vector<64x1xf32>
    %13 = vector.broadcast %5 : vector<64x1xf32> to vector<64x32xf32>
    %14 = arith.subf %1, %13 : vector<64x32xf32>
    %cst_5 = arith.constant 9.99999974E-6 : f32
    %15 = vector.broadcast %cst_5 : f32 to vector<64x1xf32>
    %16 = arith.addf %12, %15 : vector<64x1xf32>
    %17 = math.rsqrt %16 : vector<64x1xf32>
    %18 = vector.broadcast %17 : vector<64x1xf32> to vector<64x32xf32>
    %19 = arith.mulf %14, %18 : vector<64x32xf32>
    %c0_6 = arith.constant 0 : index
    %c0_7 = arith.constant 0 : index
    %20 = vector.load %arg3[%c0_6, %c0_7] : memref<1x32xf32, #tpu.memory_space<vmem>>, vector<1x32xf32>
    %21 = vector.broadcast %20 : vector<1x32xf32> to vector<64x32xf32>
    %22 = arith.mulf %19, %21 : vector<64x32xf32>
    %c0_8 = arith.constant 0 : index
    %c0_9 = arith.constant 0 : index
    %23 = vector.load %arg4[%c0_8, %c0_9] : memref<1x32xf32, #tpu.memory_space<vmem>>, vector<1x32xf32>
    %24 = vector.broadcast %23 : vector<1x32xf32> to vector<64x32xf32>
    %25 = arith.addf %22, %24 : vector<64x32xf32>
    %26 = arith.truncf %25 : vector<64x32xf32> to vector<64x32xbf16>
    %c0_10 = arith.constant 0 : index
    %c0_11 = arith.constant 0 : index
    %27 = vector.load %arg5[%c0_10, %c0_11] : memref<32x96xbf16, #tpu.memory_space<vmem>>, vector<32x96xbf16>
    %cst_12 = arith.constant dense<0.000000e+00> : vector<64x96xf32>
    %28 = tpu.matmul %26, %27, %cst_12 {dimension_numbers = #tpu.dot_dimension_numbers<[1], [0], [0], [1], [0, 0, 1, 1], [], []>} : vector<64x32xbf16>, vector<32x96xbf16>, vector<64x96xf32> -> vector<64x96xf32>
    %c0_13 = arith.constant 0 : index
    %c0_14 = arith.constant 0 : index
    %29 = vector.load %arg6[%c0_13, %c0_14] : memref<1x96xf32, #tpu.memory_space<vmem>>, vector<1x96xf32>
    %30 = vector.broadcast %29 : vector<1x96xf32> to vector<64x96xf32>
    %31 = arith.addf %28, %30 : vector<64x96xf32>
    %32 = arith.truncf %31 : vector<64x96xf32> to vector<64x96xbf16>
    %33 = vector.extract_strided_slice %32 {offsets = [0, 0], sizes = [64, 8], strides = [1, 1]} : vector<64x96xbf16> to vector<64x8xbf16>
    %c0_15 = arith.constant 0 : index
    %c0_16 = arith.constant 0 : index
    %c0_17 = arith.constant 0 : index
    %c0_18 = arith.constant 0 : index
    %34 = vector.load %arg7[%c0_15, %c0_16, %c0_17, %c0_18] : memref<1x4x64x8xbf16, #tpu.memory_space<vmem>>, vector<1x1x64x8xbf16>
    %35 = vector.shape_cast %34 : vector<1x1x64x8xbf16> to vector<64x8xbf16>
    %36 = vector.shape_cast %33 : vector<64x8xbf16> to vector<1x1x64x8xbf16>
    tpu.vector_store %arg7[%c0_15, %c0_16, %c0_17, %c0_18], %36 {strides = array<i32>} : memref<1x4x64x8xbf16, #tpu.memory_space<vmem>>, vector<1x1x64x8xbf16>,
    %37 = vector.extract_strided_slice %32 {offsets = [0, 32], sizes = [64, 8], strides = [1, 1]} : vector<64x96xbf16> to vector<64x8xbf16>
    %c0_19 = arith.constant 0 : index
    %c0_20 = arith.constant 0 : index
    %c0_21 = arith.constant 0 : index
    %c0_22 = arith.constant 0 : index
    %38 = vector.load %arg8[%c0_19, %c0_20, %c0_21, %c0_22] : memref<1x4x64x8xbf16, #tpu.memory_space<vmem>>, vector<1x1x64x8xbf16>
    %39 = vector.shape_cast %38 : vector<1x1x64x8xbf16> to vector<64x8xbf16>
    %40 = vector.shape_cast %37 : vector<64x8xbf16> to vector<1x1x64x8xbf16>
    tpu.vector_store %arg8[%c0_19, %c0_20, %c0_21, %c0_22], %40 {strides = array<i32>} : memref<1x4x64x8xbf16, #tpu.memory_space<vmem>>, vector<1x1x64x8xbf16>,
    %41 = vector.extract_strided_slice %32 {offsets = [0, 64], sizes = [64, 8], strides = [1, 1]} : vector<64x96xbf16> to vector<64x8xbf16>
    %c0_23 = arith.constant 0 : index
    %c0_24 = arith.constant 0 : index
    %c0_25 = arith.constant 0 : index
    %c0_26 = arith.constant 0 : index
    %42 = vector.load %arg9[%c0_23, %c0_24, %c0_25, %c0_26] : memref<1x4x64x8xbf16, #tpu.memory_space<vmem>>, vector<1x1x64x8xbf16>
    %43 = vector.shape_cast %42 : vector<1x1x64x8xbf16> to vector<64x8xbf16>
    %44 = vector.shape_cast %41 : vector<64x8xbf16> to vector<1x1x64x8xbf16>
    tpu.vector_store %arg9[%c0_23, %c0_24, %c0_25, %c0_26], %44 {strides = array<i32>} : memref<1x4x64x8xbf16, #tpu.memory_space<vmem>>, vector<1x1x64x8xbf16>,
    %45 = vector.extract_strided_slice %32 {offsets = [0, 8], sizes = [64, 8], strides = [1, 1]} : vector<64x96xbf16> to vector<64x8xbf16>
    %c0_27 = arith.constant 0 : index
    %c1 = arith.constant 1 : index
    %c0_28 = arith.constant 0 : index
    %c0_29 = arith.constant 0 : index
    %46 = vector.load %arg7[%c0_27, %c1, %c0_28, %c0_29] : memref<1x4x64x8xbf16, #tpu.memory_space<vmem>>, vector<1x1x64x8xbf16>
    %47 = vector.shape_cast %46 : vector<1x1x64x8xbf16> to vector<64x8xbf16>
    %48 = vector.shape_cast %45 : vector<64x8xbf16> to vector<1x1x64x8xbf16>
    tpu.vector_store %arg7[%c0_27, %c1, %c0_28, %c0_29], %48 {strides = array<i32>} : memref<1x4x64x8xbf16, #tpu.memory_space<vmem>>, vector<1x1x64x8xbf16>,
    %49 = vector.extract_strided_slice %32 {offsets = [0, 40], sizes = [64, 8], strides = [1, 1]} : vector<64x96xbf16> to vector<64x8xbf16>
    %c0_30 = arith.constant 0 : index
    %c1_31 = arith.constant 1 : index
    %c0_32 = arith.constant 0 : index
    %c0_33 = arith.constant 0 : index
    %50 = vector.load %arg8[%c0_30, %c1_31, %c0_32, %c0_33] : memref<1x4x64x8xbf16, #tpu.memory_space<vmem>>, vector<1x1x64x8xbf16>
    %51 = vector.shape_cast %50 : vector<1x1x64x8xbf16> to vector<64x8xbf16>
    %52 = vector.shape_cast %49 : vector<64x8xbf16> to vector<1x1x64x8xbf16>
    tpu.vector_store %arg8[%c0_30, %c1_31, %c0_32, %c0_33], %52 {strides = array<i32>} : memref<1x4x64x8xbf16, #tpu.memory_space<vmem>>, vector<1x1x64x8xbf16>,
    %53 = vector.extract_strided_slice %32 {offsets = [0, 72], sizes = [64, 8], strides = [1, 1]} : vector<64x96xbf16> to vector<64x8xbf16>
    %c0_34 = arith.constant 0 : index
    %c1_35 = arith.constant 1 : index
    %c0_36 = arith.constant 0 : index
    %c0_37 = arith.constant 0 : index
    %54 = vector.load %arg9[%c0_34, %c1_35, %c0_36, %c0_37] : memref<1x4x64x8xbf16, #tpu.memory_space<vmem>>, vector<1x1x64x8xbf16>
    %55 = vector.shape_cast %54 : vector<1x1x64x8xbf16> to vector<64x8xbf16>
    %56 = vector.shape_cast %53 : vector<64x8xbf16> to vector<1x1x64x8xbf16>
    tpu.vector_store %arg9[%c0_34, %c1_35, %c0_36, %c0_37], %56 {strides = array<i32>} : memref<1x4x64x8xbf16, #tpu.memory_space<vmem>>, vector<1x1x64x8xbf16>,
    %57 = vector.extract_strided_slice %32 {offsets = [0, 16], sizes = [64, 8], strides = [1, 1]} : vector<64x96xbf16> to vector<64x8xbf16>
    %c0_38 = arith.constant 0 : index
    %c2 = arith.constant 2 : index
    %c0_39 = arith.constant 0 : index
    %c0_40 = arith.constant 0 : index
    %58 = vector.load %arg7[%c0_38, %c2, %c0_39, %c0_40] : memref<1x4x64x8xbf16, #tpu.memory_space<vmem>>, vector<1x1x64x8xbf16>
    %59 = vector.shape_cast %58 : vector<1x1x64x8xbf16> to vector<64x8xbf16>
    %60 = vector.shape_cast %57 : vector<64x8xbf16> to vector<1x1x64x8xbf16>
    tpu.vector_store %arg7[%c0_38, %c2, %c0_39, %c0_40], %60 {strides = array<i32>} : memref<1x4x64x8xbf16, #tpu.memory_space<vmem>>, vector<1x1x64x8xbf16>,
    %61 = vector.extract_strided_slice %32 {offsets = [0, 48], sizes = [64, 8], strides = [1, 1]} : vector<64x96xbf16> to vector<64x8xbf16>
    %c0_41 = arith.constant 0 : index
    %c2_42 = arith.constant 2 : index
    %c0_43 = arith.constant 0 : index
    %c0_44 = arith.constant 0 : index
    %62 = vector.load %arg8[%c0_41, %c2_42, %c0_43, %c0_44] : memref<1x4x64x8xbf16, #tpu.memory_space<vmem>>, vector<1x1x64x8xbf16>
    %63 = vector.shape_cast %62 : vector<1x1x64x8xbf16> to vector<64x8xbf16>
    %64 = vector.shape_cast %61 : vector<64x8xbf16> to vector<1x1x64x8xbf16>
    tpu.vector_store %arg8[%c0_41, %c2_42, %c0_43, %c0_44], %64 {strides = array<i32>} : memref<1x4x64x8xbf16, #tpu.memory_space<vmem>>, vector<1x1x64x8xbf16>,
    %65 = vector.extract_strided_slice %32 {offsets = [0, 80], sizes = [64, 8], strides = [1, 1]} : vector<64x96xbf16> to vector<64x8xbf16>
    %c0_45 = arith.constant 0 : index
    %c2_46 = arith.constant 2 : index
    %c0_47 = arith.constant 0 : index
    %c0_48 = arith.constant 0 : index
    %66 = vector.load %arg9[%c0_45, %c2_46, %c0_47, %c0_48] : memref<1x4x64x8xbf16, #tpu.memory_space<vmem>>, vector<1x1x64x8xbf16>
    %67 = vector.shape_cast %66 : vector<1x1x64x8xbf16> to vector<64x8xbf16>
    %68 = vector.shape_cast %65 : vector<64x8xbf16> to vector<1x1x64x8xbf16>
    tpu.vector_store %arg9[%c0_45, %c2_46, %c0_47, %c0_48], %68 {strides = array<i32>} : memref<1x4x64x8xbf16, #tpu.memory_space<vmem>>, vector<1x1x64x8xbf16>,
    %69 = vector.extract_strided_slice %32 {offsets = [0, 24], sizes = [64, 8], strides = [1, 1]} : vector<64x96xbf16> to vector<64x8xbf16>
    %c0_49 = arith.constant 0 : index
    %c3 = arith.constant 3 : index
    %c0_50 = arith.constant 0 : index
    %c0_51 = arith.constant 0 : index
    %70 = vector.load %arg7[%c0_49, %c3, %c0_50, %c0_51] : memref<1x4x64x8xbf16, #tpu.memory_space<vmem>>, vector<1x1x64x8xbf16>
    %71 = vector.shape_cast %70 : vector<1x1x64x8xbf16> to vector<64x8xbf16>
    %72 = vector.shape_cast %69 : vector<64x8xbf16> to vector<1x1x64x8xbf16>
    tpu.vector_store %arg7[%c0_49, %c3, %c0_50, %c0_51], %72 {strides = array<i32>} : memref<1x4x64x8xbf16, #tpu.memory_space<vmem>>, vector<1x1x64x8xbf16>,
    %73 = vector.extract_strided_slice %32 {offsets = [0, 56], sizes = [64, 8], strides = [1, 1]} : vector<64x96xbf16> to vector<64x8xbf16>
    %c0_52 = arith.constant 0 : index
    %c3_53 = arith.constant 3 : index
    %c0_54 = arith.constant 0 : index
    %c0_55 = arith.constant 0 : index
    %74 = vector.load %arg8[%c0_52, %c3_53, %c0_54, %c0_55] : memref<1x4x64x8xbf16, #tpu.memory_space<vmem>>, vector<1x1x64x8xbf16>
    %75 = vector.shape_cast %74 : vector<1x1x64x8xbf16> to vector<64x8xbf16>
    %76 = vector.shape_cast %73 : vector<64x8xbf16> to vector<1x1x64x8xbf16>
    tpu.vector_store %arg8[%c0_52, %c3_53, %c0_54, %c0_55], %76 {strides = array<i32>} : memref<1x4x64x8xbf16, #tpu.memory_space<vmem>>, vector<1x1x64x8xbf16>,
    %77 = vector.extract_strided_slice %32 {offsets = [0, 88], sizes = [64, 8], strides = [1, 1]} : vector<64x96xbf16> to vector<64x8xbf16>
    %c0_56 = arith.constant 0 : index
    %c3_57 = arith.constant 3 : index
    %c0_58 = arith.constant 0 : index
    %c0_59 = arith.constant 0 : index
    %78 = vector.load %arg9[%c0_56, %c3_57, %c0_58, %c0_59] : memref<1x4x64x8xbf16, #tpu.memory_space<vmem>>, vector<1x1x64x8xbf16>
    %79 = vector.shape_cast %78 : vector<1x1x64x8xbf16> to vector<64x8xbf16>
    %80 = vector.shape_cast %77 : vector<64x8xbf16> to vector<1x1x64x8xbf16>
    tpu.vector_store %arg9[%c0_56, %c3_57, %c0_58, %c0_59], %80 {strides = array<i32>} : memref<1x4x64x8xbf16, #tpu.memory_space<vmem>>, vector<1x1x64x8xbf16>,
    return
  }
  func.func @transform_0(%arg0: i32, %arg1: i32) -> (i32, i32, i32) {
    %c0_i32 = arith.constant 0 : i32
    %c0_i32_0 = arith.constant 0 : i32
    return %arg0, %arg1, %c0_i32 : i32, i32, i32
  }
  func.func @transform_1(%arg0: i32, %arg1: i32) -> (i32, i32) {
    %c0_i32 = arith.constant 0 : i32
    %c0_i32_0 = arith.constant 0 : i32
    %c0_i32_1 = arith.constant 0 : i32
    return %c0_i32, %c0_i32_0 : i32, i32
  }
  func.func @transform_2(%arg0: i32, %arg1: i32) -> (i32, i32) {
    %c0_i32 = arith.constant 0 : i32
    %c0_i32_0 = arith.constant 0 : i32
    %c0_i32_1 = arith.constant 0 : i32
    return %c0_i32, %c0_i32_0 : i32, i32
  }
  func.func @transform_3(%arg0: i32, %arg1: i32) -> (i32, i32) {
    %c0_i32 = arith.constant 0 : i32
    %c0_i32_0 = arith.constant 0 : i32
    %c0_i32_1 = arith.constant 0 : i32
    return %c0_i32, %c0_i32_0 : i32, i32
  }
  func.func @transform_4(%arg0: i32, %arg1: i32) -> (i32, i32) {
    %c0_i32 = arith.constant 0 : i32
    %c0_i32_0 = arith.constant 0 : i32
    %c0_i32_1 = arith.constant 0 : i32
    return %c0_i32, %c0_i32_0 : i32, i32
  }
  func.func @transform_5(%arg0: i32, %arg1: i32) -> (i32, i32, i32, i32) {
    %c0_i32 = arith.constant 0 : i32
    %c0_i32_0 = arith.constant 0 : i32
    %c0_i32_1 = arith.constant 0 : i32
    return %arg0, %c0_i32, %arg1, %c0_i32_0 : i32, i32, i32, i32
  }
  func.func @transform_6(%arg0: i32, %arg1: i32) -> (i32, i32, i32, i32) {
    %c0_i32 = arith.constant 0 : i32
    %c0_i32_0 = arith.constant 0 : i32
    %c0_i32_1 = arith.constant 0 : i32
    return %arg0, %c0_i32, %arg1, %c0_i32_0 : i32, i32, i32, i32
  }
  func.func @transform_7(%arg0: i32, %arg1: i32) -> (i32, i32, i32, i32) {
    %c0_i32 = arith.constant 0 : i32
    %c0_i32_0 = arith.constant 0 : i32
    %c0_i32_1 = arith.constant 0 : i32
    return %arg0, %c0_i32, %arg1, %c0_i32_0 : i32, i32, i32, i32
  }
}

</mosaic_0001>

<llo_original>
// kernel: tpu_custom_call.1
$region0: #{tpu_custom_call.1}
  #allocation0 [shape = 'u32[]', space=smem, size = 0x4, offset = 0x4, fixed_abs, tag = 'smem constant byte address 0x4 - core index']
  #allocation1 [shape = 'u32[144,128]{1,0:T(1,128)}', space=vmem, size = 0x12000, scoped, tag = 'internal scratch']
  %s0 = inlined_call_operand.vmem [shape: f32[2,64,32], index: 0, kind: input, shape index: {}]
  %s1 = inlined_call_operand.vmem [shape: f32[1,32], index: 1, kind: input, shape index: {}]
  %s2 = inlined_call_operand.vmem [shape: f32[1,32], index: 2, kind: input, shape index: {}]
  %s3 = inlined_call_operand.vmem [shape: bf16[32,96], index: 3, kind: input, shape index: {}]
  %s4 = inlined_call_operand.vmem [shape: f32[1,96], index: 4, kind: input, shape index: {}]
  %s5 = inlined_call_operand.vmem [shape: bf16[2,4,64,8], index: 5, kind: output, shape index: {0}]
  %s6 = inlined_call_operand.vmem [shape: bf16[2,4,64,8], index: 6, kind: output, shape index: {1}]
  %s7 = inlined_call_operand.vmem [shape: bf16[2,4,64,8], index: 7, kind: output, shape index: {2}]
  %8 = xla_tuple %s5, %s6, %s7
  %s9 = sld [smem:[#allocation0]]
  $region69: #{tpu_custom_call.1} parent=0
    _
  %s11 = ssub.s32 1, %s9
  %s12 = scalar_select 0, %s11, %s9
  loop: start=0, step=1, limit=4
  $region2: #{tpu_custom_call.1} parent=0 // loop_pre_header
    _
  $region3: #{tpu_custom_call.1} parent=0 // loop_header
    %s14 = sphi 0, %s18
    %p15 = scmp.ge.s32.totalorder %s14, 4
    %s21 = sphi 0, %s33
    %s22 = sphi 0, %s29
    %s23 = sphi 0, %s21
    %s24 = sphi 0, %s22
    %s25 = sphi 0, %s23
    %s26 = sphi 0, %s24
    %s38 = sphi 0, %s40
    %s41 = sphi 0, %s38
    %s42 = sphi 0, %s41
    %s58 = sphi 0, %s42
    %s62 = sphi 0, %s62
    %s64 = sphi 0, %s62
    %s65 = sphi 0, %s64
    %s79 = sphi 0, %s65
    %s83 = sphi 0, %s83
    %s85 = sphi 0, %s83
    %s86 = sphi 0, %s85
    %s100 = sphi 0, %s86
    %s104 = sphi 0, %s104
    %s106 = sphi 0, %s104
    %s107 = sphi 0, %s106
    %s121 = sphi 0, %s107
    %s125 = sphi 0, %s125
    %s127 = sphi 0, %s125
    %s128 = sphi 0, %s127
    %s142 = sphi 0, %s128
    %s150 = sphi 0, %s152
    %s153 = sphi 0, %s150
    %s154 = sphi 0, %s153
    %s170 = sphi 0, %s154
    %s178 = sphi 0, %s180
    %s181 = sphi 0, %s178
    %s182 = sphi 0, %s181
    %s198 = sphi 0, %s182
    %s206 = sphi 0, %s208
    %s209 = sphi 0, %s206
    %s210 = sphi 0, %s209
    %s226 = sphi 0, %s210
  $region4: #{tpu_custom_call.1} parent=0 // loop_header_branch
    %17 = sbr.rel (%p15) target = $region8
  $region5: #{tpu_custom_call.1} parent=0 // loop_body
    %s19 = ssub.s32 %s14, 1
    %s20 = ssub.s32 %s14, 2
    %s27 = sadd.s32 1, %s22
    %p28 = scmp.ge.s32.totalorder %s27, 1
    %s29 = scalar_select %p28, 0, %s27
    %s30 = sadd.s32 1, %s21
    %s31 = scalar_select %p28, %s30, %s21
    %p32 = scmp.ge.s32.totalorder %s31, 2
    %s33 = scalar_select %p32, 0, %s31
    %s34 = ssub.s32 %s21, %s33
    %s35 = ssub.s32 %s22, %s29
    %s36 = sor.u32 %s34, %s35
    %p37 = scmp.eq.s32.totalorder %s36, 0
    %s39 = sadd.s32 %s38, 1
    %s40 = scalar_select %p37, %s38, %s39
    %p43 = pneg %p37
    %p44 = scmp.eq.s32.totalorder %s14, 1
    %p45 = por %p43, %p44
    %p46 = scmp.ne.s32.totalorder %s38, %s41
    %p47 = scmp.eq.s32.totalorder %s14, 0
    %p48 = por %p46, %p47
    %p49 = scmp.ne.s32.totalorder %s38, %s41
    %p50 = scmp.eq.s32.totalorder %s19, 1
    %p51 = por %p49, %p50
    %p52 = scmp.ne.s32.totalorder %s41, %s42
    %p53 = scmp.eq.s32.totalorder %s19, 0
    %p54 = por %p52, %p53
    %p55 = scmp.ne.s32.totalorder %s41, %s42
    %p56 = scmp.eq.s32.totalorder %s20, 1
    %p57 = por %p55, %p56
    %p59 = scmp.ne.s32.totalorder %s42, %s58
    %p60 = scmp.eq.s32.totalorder %s20, 0
    %p61 = por %p59, %p60
    %s63 = sadd.s32 %s62, 1
    %p66 = scmp.eq.s32.totalorder %s14, 1
    %p67 = scmp.ne.s32.totalorder %s62, %s64
    %p68 = scmp.eq.s32.totalorder %s14, 0
    %p69 = por %p67, %p68
    %p70 = scmp.ne.s32.totalorder %s62, %s64
    %p71 = scmp.eq.s32.totalorder %s19, 1
    %p72 = por %p70, %p71
    %p73 = scmp.ne.s32.totalorder %s64, %s65
    %p74 = scmp.eq.s32.totalorder %s19, 0
    %p75 = por %p73, %p74
    %p76 = scmp.ne.s32.totalorder %s64, %s65
    %p77 = scmp.eq.s32.totalorder %s20, 1
    %p78 = por %p76, %p77
    %p80 = scmp.ne.s32.totalorder %s65, %s79
    %p81 = scmp.eq.s32.totalorder %s20, 0
    %p82 = por %p80, %p81
    %s84 = sadd.s32 %s83, 1
    %p87 = scmp.eq.s32.totalorder %s14, 1
    %p88 = scmp.ne.s32.totalorder %s83, %s85
    %p89 = scmp.eq.s32.totalorder %s14, 0
    %p90 = por %p88, %p89
    %p91 = scmp.ne.s32.totalorder %s83, %s85
    %p92 = scmp.eq.s32.totalorder %s19, 1
    %p93 = por %p91, %p92
    %p94 = scmp.ne.s32.totalorder %s85, %s86
    %p95 = scmp.eq.s32.totalorder %s19, 0
    %p96 = por %p94, %p95
    %p97 = scmp.ne.s32.totalorder %s85, %s86
    %p98 = scmp.eq.s32.totalorder %s20, 1
    %p99 = por %p97, %p98
    %p101 = scmp.ne.s32.totalorder %s86, %s100
    %p102 = scmp.eq.s32.totalorder %s20, 0
    %p103 = por %p101, %p102
    %s105 = sadd.s32 %s104, 1
    %p108 = scmp.eq.s32.totalorder %s14, 1
    %p109 = scmp.ne.s32.totalorder %s104, %s106
    %p110 = scmp.eq.s32.totalorder %s14, 0
    %p111 = por %p109, %p110
    %p112 = scmp.ne.s32.totalorder %s104, %s106
    %p113 = scmp.eq.s32.totalorder %s19, 1
    %p114 = por %p112, %p113
    %p115 = scmp.ne.s32.totalorder %s106, %s107
    %p116 = scmp.eq.s32.totalorder %s19, 0
    %p117 = por %p115, %p116
    %p118 = scmp.ne.s32.totalorder %s106, %s107
    %p119 = scmp.eq.s32.totalorder %s20, 1
    %p120 = por %p118, %p119
    %p122 = scmp.ne.s32.totalorder %s107, %s121
    %p123 = scmp.eq.s32.totalorder %s20, 0
    %p124 = por %p122, %p123
    %s126 = sadd.s32 %s125, 1
    %p129 = scmp.eq.s32.totalorder %s14, 1
    %p130 = scmp.ne.s32.totalorder %s125, %s127
    %p131 = scmp.eq.s32.totalorder %s14, 0
    %p132 = por %p130, %p131
    %p133 = scmp.ne.s32.totalorder %s125, %s127
    %p134 = scmp.eq.s32.totalorder %s19, 1
    %p135 = por %p133, %p134
    %p136 = scmp.ne.s32.totalorder %s127, %s128
    %p137 = scmp.eq.s32.totalorder %s19, 0
    %p138 = por %p136, %p137
    %p139 = scmp.ne.s32.totalorder %s127, %s128
    %p140 = scmp.eq.s32.totalorder %s20, 1
    %p141 = por %p139, %p140
    %p143 = scmp.ne.s32.totalorder %s128, %s142
    %p144 = scmp.eq.s32.totalorder %s20, 0
    %p145 = por %p143, %p144
    %s146 = ssub.s32 %s21, %s33
    %s147 = ssub.s32 %s22, %s29
    %s148 = sor.u32 %s146, %s147
    %p149 = scmp.eq.s32.totalorder %s148, 0
    %s151 = sadd.s32 %s150, 1
    %s152 = scalar_select %p149, %s150, %s151
    %p155 = pneg %p149
    %p156 = scmp.eq.s32.totalorder %s14, 1
    %p157 = por %p155, %p156
    %p158 = scmp.ne.s32.totalorder %s150, %s153
    %p159 = scmp.eq.s32.totalorder %s14, 0
    %p160 = por %p158, %p159
    %p161 = scmp.ne.s32.totalorder %s150, %s153
    %p162 = scmp.eq.s32.totalorder %s19, 1
    %p163 = por %p161, %p162
    %p164 = scmp.ne.s32.totalorder %s153, %s154
    %p165 = scmp.eq.s32.totalorder %s19, 0
    %p166 = por %p164, %p165
    %p167 = scmp.ne.s32.totalorder %s153, %s154
    %p168 = scmp.eq.s32.totalorder %s20, 1
    %p169 = por %p167, %p168
    %p171 = scmp.ne.s32.totalorder %s154, %s170
    %p172 = scmp.eq.s32.totalorder %s20, 0
    %p173 = por %p171, %p172
    %s174 = ssub.s32 %s21, %s33
    %s175 = ssub.s32 %s22, %s29
    %s176 = sor.u32 %s174, %s175
    %p177 = scmp.eq.s32.totalorder %s176, 0
    %s179 = sadd.s32 %s178, 1
    %s180 = scalar_select %p177, %s178, %s179
    %p183 = pneg %p177
    %p184 = scmp.eq.s32.totalorder %s14, 1
    %p185 = por %p183, %p184
    %p186 = scmp.ne.s32.totalorder %s178, %s181
    %p187 = scmp.eq.s32.totalorder %s14, 0
    %p188 = por %p186, %p187
    %p189 = scmp.ne.s32.totalorder %s178, %s181
    %p190 = scmp.eq.s32.totalorder %s19, 1
    %p191 = por %p189, %p190
    %p192 = scmp.ne.s32.totalorder %s181, %s182
    %p193 = scmp.eq.s32.totalorder %s19, 0
    %p194 = por %p192, %p193
    %p195 = scmp.ne.s32.totalorder %s181, %s182
    %p196 = scmp.eq.s32.totalorder %s20, 1
    %p197 = por %p195, %p196
    %p199 = scmp.ne.s32.totalorder %s182, %s198
    %p200 = scmp.eq.s32.totalorder %s20, 0
    %p201 = por %p199, %p200
    %s202 = ssub.s32 %s21, %s33
    %s203 = ssub.s32 %s22, %s29
    %s204 = sor.u32 %s202, %s203
    %p205 = scmp.eq.s32.totalorder %s204, 0
    %s207 = sadd.s32 %s206, 1
    %s208 = scalar_select %p205, %s206, %s207
    %p211 = pneg %p205
    %p212 = scmp.eq.s32.totalorder %s14, 1
    %p213 = por %p211, %p212
    %p214 = scmp.ne.s32.totalorder %s206, %s209
    %p215 = scmp.eq.s32.totalorder %s14, 0
    %p216 = por %p214, %p215
    %p217 = scmp.ne.s32.totalorder %s206, %s209
    %p218 = scmp.eq.s32.totalorder %s19, 1
    %p219 = por %p217, %p218
    %p220 = scmp.ne.s32.totalorder %s209, %s210
    %p221 = scmp.eq.s32.totalorder %s19, 0
    %p222 = por %p220, %p221
    %p223 = scmp.ne.s32.totalorder %s209, %s210
    %p224 = scmp.eq.s32.totalorder %s20, 1
    %p225 = por %p223, %p224
    %p227 = scmp.ne.s32.totalorder %s210, %s226
    %p228 = scmp.eq.s32.totalorder %s20, 0
    %p229 = por %p227, %p228
    %p230 = scmp.le.s32.totalorder 1, %s14
    %p231 = scmp.lt.s32.totalorder %s14, 3
    %p232 = pnand %p230, %p231
    %p233 = pneg %p232
    // Predicated region
    $region9: #{tpu_custom_call.1} parent=5 // pred_check
      _
    $region10: #{tpu_custom_call.1} parent=5 // pred_check_branch
      %235 = sbr.rel (%p232) target = $region12
    $region11: #{tpu_custom_call.1} parent=5 // pred_region
      %s236 = ssub.s32 %s14, 1
      // Predicated region
      $region13: #{tpu_custom_call.1} parent=11 // pred_check
        %p237 = pneg %p75
      $region14: #{tpu_custom_call.1} parent=11 // pred_check_branch
        %239 = sbr.rel (%p237) target = $region16
      $region15: #{tpu_custom_call.1} parent=11 // pred_region
        _
      $region16: #{tpu_custom_call.1} parent=11 // pred_fallthru
        _
      // Predicated region
      $region17: #{tpu_custom_call.1} parent=11 // pred_check
        %p240 = pneg %p96
      $region18: #{tpu_custom_call.1} parent=11 // pred_check_branch
        %242 = sbr.rel (%p240) target = $region20
      $region19: #{tpu_custom_call.1} parent=11 // pred_region
        _
      $region20: #{tpu_custom_call.1} parent=11 // pred_fallthru
        _
      // Predicated region
      $region21: #{tpu_custom_call.1} parent=11 // pred_check
        %p243 = pneg %p117
      $region22: #{tpu_custom_call.1} parent=11 // pred_check_branch
        %245 = sbr.rel (%p243) target = $region24
      $region23: #{tpu_custom_call.1} parent=11 // pred_region
        _
      $region24: #{tpu_custom_call.1} parent=11 // pred_fallthru
        _
      // Predicated region
      $region25: #{tpu_custom_call.1} parent=11 // pred_check
        %p246 = pneg %p138
      $region26: #{tpu_custom_call.1} parent=11 // pred_check_branch
        %248 = sbr.rel (%p246) target = $region28
      $region27: #{tpu_custom_call.1} parent=11 // pred_region
        _
      $region28: #{tpu_custom_call.1} parent=11 // pred_fallthru
        _
    $region12: #{tpu_custom_call.1} parent=5 // pred_fallthru
      _
    %p249 = scmp.lt.s32.totalorder %s14, 2
    // Predicated region
    $region29: #{tpu_custom_call.1} parent=5 // pred_check
      %p250 = pneg %p249
    $region30: #{tpu_custom_call.1} parent=5 // pred_check_branch
      %252 = sbr.rel (%p250) target = $region32
    $region31: #{tpu_custom_call.1} parent=5 // pred_region
      // Predicated region
      $region33: #{tpu_custom_call.1} parent=31 // pred_check
        %p253 = pneg %p48
      $region34: #{tpu_custom_call.1} parent=31 // pred_check_branch
        %255 = sbr.rel (%p253) target = $region36
      $region35: #{tpu_custom_call.1} parent=31 // pred_region
        %s256 = smul.u32 8, %s22
        %p257 = scmp.lt.s32.totalorder %s21, 1
        %s258 = scalar_select %p257, %s21, 1
        %p259 = scmp.lt.s32.totalorder %s256, 7
        %s260 = scalar_select %p259, %s256, 7
        %s261 = smul.addr %s258, 8
        %s262 = sadd.s32 %s260, %s261
        %s263 = smul.addr %s262, 8
        %s264 = scalar_lea.vmem %s0, %s263
        %s265 = smul.u32 8, %s22
      $region36: #{tpu_custom_call.1} parent=31 // pred_fallthru
        _
    $region32: #{tpu_custom_call.1} parent=5 // pred_fallthru
      _
    %p266 = scmp.le.s32.totalorder 1, %s14
    %p267 = scmp.lt.s32.totalorder %s14, 3
    %p268 = pnand %p266, %p267
    %p269 = pneg %p268
    // Predicated region
    $region37: #{tpu_custom_call.1} parent=5 // pred_check
      _
    $region38: #{tpu_custom_call.1} parent=5 // pred_check_branch
      %271 = sbr.rel (%p268) target = $region40
    $region39: #{tpu_custom_call.1} parent=5 // pred_region
      %s272 = ssub.s32 %s14, 1
      %s273 = smul.u32 8, %s24
      %p274 = scmp.lt.s32.totalorder %s23, 1
      %s275 = scalar_select %p274, %s23, 1
      %p276 = scmp.lt.s32.totalorder %s273, 7
      %s277 = scalar_select %p276, %s273, 7
      %s278 = smul.addr %s275, 8
      %s279 = sadd.s32 %s277, %s278
      %s280 = smul.addr %s279, 8
      %s281 = scalar_lea.vmem %s0, %s280
      %p282 = pneg %p54
      %p283 = pneg %p51
      %p284 = pneg %p75
      %p285 = pneg %p72
      %p286 = pneg %p96
      %p287 = pneg %p93
      %p288 = pneg %p117
      %p289 = pneg %p114
      %p290 = pneg %p138
      %p291 = pneg %p135
      %p292 = pneg %p166
      %p293 = pneg %p163
      %s294 = smul.u32 8, %s24
      %p295 = scmp.lt.s32.totalorder %s23, 1
      %s296 = scalar_select %p295, %s23, 1
      %p297 = scmp.lt.s32.totalorder %s294, 7
      %s298 = scalar_select %p297, %s294, 7
      %s299 = smul.addr %s296, 32
      %s300 = sadd.s32 %s298, %s299
      %s301 = smul.addr %s300, 4
      %s302 = scalar_lea.vmem %s5, %s301
      %p303 = pneg %p194
      %p304 = pneg %p191
      %s305 = smul.u32 8, %s24
      %p306 = scmp.lt.s32.totalorder %s23, 1
      %s307 = scalar_select %p306, %s23, 1
      %p308 = scmp.lt.s32.totalorder %s305, 7
      %s309 = scalar_select %p308, %s305, 7
      %s310 = smul.addr %s307, 32
      %s311 = sadd.s32 %s309, %s310
      %s312 = smul.addr %s311, 4
      %s313 = scalar_lea.vmem %s6, %s312
      %p314 = pneg %p222
      %p315 = pneg %p219
      %s316 = smul.u32 8, %s24
      %p317 = scmp.lt.s32.totalorder %s23, 1
      %s318 = scalar_select %p317, %s23, 1
      %p319 = scmp.lt.s32.totalorder %s316, 7
      %s320 = scalar_select %p319, %s316, 7
      %s321 = smul.addr %s318, 32
      %s322 = sadd.s32 %s320, %s321
      %s323 = smul.addr %s322, 4
      %s324 = scalar_lea.vmem %s7, %s323
      %s325 = smul.u32 8, %s24
      %p326 = scmp.lt.s32.totalorder %s23, 1
      %s327 = scalar_select %p326, %s23, 1
      %p328 = scmp.lt.s32.totalorder %s325, 7
      %s329 = scalar_select %p328, %s325, 7
      %s330 = smul.addr %s327, 8
      %s331 = sadd.s32 %s329, %s330
      %s332 = smul.addr %s331, 8
      %s333 = scalar_lea.vmem %s0, %s332
      %s334 = smul.u32 8, %s24
      %s335 = smul.u32 8, %s24
      %p336 = scmp.lt.s32.totalorder %s23, 1
      %s337 = scalar_select %p336, %s23, 1
      %p338 = scmp.lt.s32.totalorder %s335, 7
      %s339 = scalar_select %p338, %s335, 7
      %s340 = smul.addr %s337, 32
      %s341 = sadd.s32 %s339, %s340
      %s342 = smul.addr %s341, 4
      %s343 = scalar_lea.vmem %s5, %s342
      %s344 = smul.u32 8, %s24
      %s345 = smul.u32 8, %s24
      %p346 = scmp.lt.s32.totalorder %s23, 1
      %s347 = scalar_select %p346, %s23, 1
      %p348 = scmp.lt.s32.totalorder %s345, 7
      %s349 = scalar_select %p348, %s345, 7
      %s350 = smul.addr %s347, 32
      %s351 = sadd.s32 %s349, %s350
      %s352 = smul.addr %s351, 4
      %s353 = scalar_lea.vmem %s6, %s352
      %s354 = smul.u32 8, %s24
      %s355 = smul.u32 8, %s24
      %p356 = scmp.lt.s32.totalorder %s23, 1
      %s357 = scalar_select %p356, %s23, 1
      %p358 = scmp.lt.s32.totalorder %s355, 7
      %s359 = scalar_select %p358, %s355, 7
      %s360 = smul.addr %s357, 32
      %s361 = sadd.s32 %s359, %s360
      %s362 = smul.addr %s361, 4
      %s363 = scalar_lea.vmem %s7, %s362
      %s364 = smul.u32 8, %s24
      %v366 = vld [vmem:[%s333] sm:$0xff]
      %v367 = vld [vmem:[%s333 + $0x8] sm:$0xff]
      %v368 = vld [vmem:[%s333 + $0x10] sm:$0xff]
      %v369 = vld [vmem:[%s333 + $0x18] sm:$0xff]
      %v370 = vld [vmem:[%s333 + $0x20] sm:$0xff]
      %v371 = vld [vmem:[%s333 + $0x28] sm:$0xff]
      %v372 = vld [vmem:[%s333 + $0x30] sm:$0xff]
      %v373 = vld [vmem:[%s333 + $0x38] sm:$0xff]
      %vm374 = vcmask 261120
      %v375 = vsel %vm374, %v366, 0.0
      %376 = vadd.xlane.f32.xlu0 %v375
      %v377 = vpop.xlane.xlu0 %376
      %v378 = vsel %vm374, %v367, 0.0
      %379 = vadd.xlane.f32.xlu0 %v378
      %v380 = vpop.xlane.xlu0 %379
      %v381 = vsel %vm374, %v368, 0.0
      %382 = vadd.xlane.f32.xlu0 %v381
      %v383 = vpop.xlane.xlu0 %382
      %v384 = vsel %vm374, %v369, 0.0
      %385 = vadd.xlane.f32.xlu0 %v384
      %v386 = vpop.xlane.xlu0 %385
      %v387 = vsel %vm374, %v370, 0.0
      %388 = vadd.xlane.f32.xlu0 %v387
      %v389 = vpop.xlane.xlu0 %388
      %v390 = vsel %vm374, %v371, 0.0
      %391 = vadd.xlane.f32.xlu0 %v390
      %v392 = vpop.xlane.xlu0 %391
      %v393 = vsel %vm374, %v372, 0.0
      %394 = vadd.xlane.f32.xlu0 %v393
      %v395 = vpop.xlane.xlu0 %394
      %v396 = vsel %vm374, %v373, 0.0
      %397 = vadd.xlane.f32.xlu0 %v396
      %v398 = vpop.xlane.xlu0 %397
      %v399 = vrcp.pop 32.0
      %v400 = vmul.f32 %v377, %v399
      %v401 = vmul.f32 %v380, %v399
      %v402 = vmul.f32 %v383, %v399
      %v403 = vmul.f32 %v386, %v399
      %v404 = vmul.f32 %v389, %v399
      %v405 = vmul.f32 %v392, %v399
      %v406 = vmul.f32 %v395, %v399
      %v407 = vmul.f32 %v398, %v399
      %v408 = vsub.f32 %v366, %v400
      %v409 = vsub.f32 %v367, %v401
      %v410 = vsub.f32 %v368, %v402
      %v411 = vsub.f32 %v369, %v403
      %v412 = vsub.f32 %v370, %v404
      %v413 = vsub.f32 %v371, %v405
      %v414 = vsub.f32 %v372, %v406
      %v415 = vsub.f32 %v373, %v407
      %v416 = vmul.f32 %v408, %v408
      %v417 = vmul.f32 %v409, %v409
      %v418 = vmul.f32 %v410, %v410
      %v419 = vmul.f32 %v411, %v411
      %v420 = vmul.f32 %v412, %v412
      %v421 = vmul.f32 %v413, %v413
      %v422 = vmul.f32 %v414, %v414
      %v423 = vmul.f32 %v415, %v415
      %v424 = vsel %vm374, %v416, 0.0
      %425 = vadd.xlane.f32.xlu0 %v424
      %v426 = vpop.xlane.xlu0 %425
      %v427 = vsel %vm374, %v417, 0.0
      %428 = vadd.xlane.f32.xlu0 %v427
      %v429 = vpop.xlane.xlu0 %428
      %v430 = vsel %vm374, %v418, 0.0
      %431 = vadd.xlane.f32.xlu0 %v430
      %v432 = vpop.xlane.xlu0 %431
      %v433 = vsel %vm374, %v419, 0.0
      %434 = vadd.xlane.f32.xlu0 %v433
      %v435 = vpop.xlane.xlu0 %434
      %v436 = vsel %vm374, %v420, 0.0
      %437 = vadd.xlane.f32.xlu0 %v436
      %v438 = vpop.xlane.xlu0 %437
      %v439 = vsel %vm374, %v421, 0.0
      %440 = vadd.xlane.f32.xlu0 %v439
      %v441 = vpop.xlane.xlu0 %440
      %v442 = vsel %vm374, %v422, 0.0
      %443 = vadd.xlane.f32.xlu0 %v442
      %v444 = vpop.xlane.xlu0 %443
      %v445 = vsel %vm374, %v423, 0.0
      %446 = vadd.xlane.f32.xlu0 %v445
      %v447 = vpop.xlane.xlu0 %446
      %v448 = vmul.f32 %v426, %v399
      %v449 = vmul.f32 %v429, %v399
      %v450 = vmul.f32 %v432, %v399
      %v451 = vmul.f32 %v435, %v399
      %v452 = vmul.f32 %v438, %v399
      %v453 = vmul.f32 %v441, %v399
      %v454 = vmul.f32 %v444, %v399
      %v455 = vmul.f32 %v447, %v399
      %v456 = vadd.f32 %v448, 1e-05
      %v457 = vadd.f32 %v449, 1e-05
      %v458 = vadd.f32 %v450, 1e-05
      %v459 = vadd.f32 %v451, 1e-05
      %v460 = vadd.f32 %v452, 1e-05
      %v461 = vadd.f32 %v453, 1e-05
      %v462 = vadd.f32 %v454, 1e-05
      %v463 = vadd.f32 %v455, 1e-05
      %v464 = vrsqrt.pop %v456
      %v465 = vrsqrt.pop %v457
      %v466 = vrsqrt.pop %v458
      %v467 = vrsqrt.pop %v459
      %v468 = vrsqrt.pop %v460
      %v469 = vrsqrt.pop %v461
      %v470 = vrsqrt.pop %v462
      %v471 = vrsqrt.pop %v463
      %v472 = vmul.f32 %v408, %v464
      %v473 = vmul.f32 %v409, %v465
      %v474 = vmul.f32 %v410, %v466
      %v475 = vmul.f32 %v411, %v467
      %v476 = vmul.f32 %v412, %v468
      %v477 = vmul.f32 %v413, %v469
      %v478 = vmul.f32 %v414, %v470
      %v479 = vmul.f32 %v415, %v471
      %v480 = vld [vmem:[%s1] sm:$0x1]
      %v482 = vlaneseq
      %v483 = vshrl.u32 %v482, 7
      %v484 = vsub.s32 0, %v483
      %v485 = vrot.slane %v480, %v484
      %v487 = vmul.f32 %v472, %v485
      %v488 = vmul.f32 %v473, %v485
      %v489 = vmul.f32 %v474, %v485
      %v490 = vmul.f32 %v475, %v485
      %v491 = vmul.f32 %v476, %v485
      %v492 = vmul.f32 %v477, %v485
      %v493 = vmul.f32 %v478, %v485
      %v494 = vmul.f32 %v479, %v485
      %v495 = vld [vmem:[%s2] sm:$0x1]
      %v497 = vlaneseq
      %v498 = vshrl.u32 %v497, 7
      %v499 = vsub.s32 0, %v498
      %v500 = vrot.slane %v495, %v499
      %v502 = vadd.f32 %v487, %v500
      %v503 = vadd.f32 %v488, %v500
      %v504 = vadd.f32 %v489, %v500
      %v505 = vadd.f32 %v490, %v500
      %v506 = vadd.f32 %v491, %v500
      %v507 = vadd.f32 %v492, %v500
      %v508 = vadd.f32 %v493, %v500
      %v509 = vadd.f32 %v494, %v500
      %v510 = vpack.c.bf16 %v503, %v502
      %v511 = vpack.c.bf16 %v505, %v504
      %v512 = vpack.c.bf16 %v507, %v506
      %v513 = vpack.c.bf16 %v509, %v508
      %v514 = vld [vmem:[%s3] sm:$0xf]
      %v515 = vld [vmem:[%s3 + $0x4] sm:$0xf]
      %v516 = vld [vmem:[%s3 + $0x8] sm:$0xf]
      %v517 = vld [vmem:[%s3 + $0xc] sm:$0xf]
      %v518 = vld [vmem:[%s4] sm:$0x1]
      %v520 = vlaneseq
      %v521 = vshrl.u32 %v520, 7
      %v522 = vsub.s32 0, %v521
      %v523 = vrot.slane %v518, %v522
      %v529 = vunpack.c.l.b16 %v514
      %v530 = vunpack.c.l.b16 %v515
      %v531 = vunpack.c.l.b16 %v516
      %v532 = vunpack.c.l.b16 %v517
      %v533 = vpack.c.b16 %v530, %v529
      %v534 = vpack.c.b16 %v532, %v531
      %v538 = vsel %vm374, %v510, 0
      %v541 = vsel %vm374, %v511, 0
      %v544 = vsel %vm374, %v512, 0
      %v547 = vsel %vm374, %v513, 0
      %549 = vmatprep.subr.bf16.mxu0 0
      %550 = vmatpush1.bf16.msra.mxu0 %v533
      %551 = vmatprep.subr.bf16.mxu0 0
      %552 = vmatpush1.bf16.msra.mxu0 %v534
      %553 = vmatprep.subr.bf16.mxu0 0
      %554 = vmatpush1.bf16.msra.mxu0 0
      %555 = vmatprep.subr.bf16.mxu0 0
      %556 = vmatpush1.bf16.msra.mxu0 0
      %557 = vmatprep.subr.bf16.mxu0 0
      %558 = vmatpush1.bf16.msra.mxu0 0
      %559 = vmatprep.subr.bf16.mxu0 0
      %560 = vmatpush1.bf16.msra.mxu0 0
      %561 = vmatprep.subr.bf16.mxu0 0
      %562 = vmatpush1.bf16.msra.mxu0 0
      %563 = vmatprep.subr.bf16.mxu0 0
      %564 = vmatpush1.bf16.msra.mxu0 0
      %565 = vmatprep.subr.bf16.mxu0 0
      %566 = vmatpush1.bf16.msra.mxu0 0
      %567 = vmatprep.subr.bf16.mxu0 0
      %568 = vmatpush1.bf16.msra.mxu0 0
      %569 = vmatprep.subr.bf16.mxu0 0
      %570 = vmatpush1.bf16.msra.mxu0 0
      %571 = vmatprep.subr.bf16.mxu0 0
      %572 = vmatpush1.bf16.msra.mxu0 0
      %573 = vmatprep.subr.bf16.mxu0 0
      %574 = vmatpush1.bf16.msra.mxu0 0
      %575 = vmatprep.subr.bf16.mxu0 0
      %576 = vmatpush1.bf16.msra.mxu0 0
      %577 = vmatprep.subr.bf16.mxu0 0
      %578 = vmatpush1.bf16.msra.mxu0 0
      %579 = vmatprep.subr.bf16.mxu0 0
      %580 = vmatpush1.bf16.msra.mxu0 0
      %581 = vmatprep.mubr.bf16.mxu0 0
      %582 = vmatmul.mubr.bf16.gmra.mrb[0].mxu0 %v538
      %v583 = vpop.f32.mrb[0].mxu0
      %v584 = vadd.f32 %v523, %v583
      %v585 = vpop.f32.mrb[0].mxu0
      %v586 = vpop.f32.mrb[0].mxu0
      %v587 = vadd.f32 %v523, %v586
      %v588 = vpop.f32.mrb[0].mxu0
      %589 = vmatprep.mubr.bf16.mxu0 0
      %590 = vmatmul.mubr.bf16.gmra.mrb[0].mxu0 %v541
      %v591 = vpop.f32.mrb[0].mxu0
      %v592 = vadd.f32 %v523, %v591
      %v593 = vpop.f32.mrb[0].mxu0
      %v594 = vpop.f32.mrb[0].mxu0
      %v595 = vadd.f32 %v523, %v594
      %v596 = vpop.f32.mrb[0].mxu0
      %597 = vmatprep.mubr.bf16.mxu0 0
      %598 = vmatmul.mubr.bf16.gmra.mrb[0].mxu0 %v544
      %v599 = vpop.f32.mrb[0].mxu0
      %v600 = vadd.f32 %v523, %v599
      %v601 = vpop.f32.mrb[0].mxu0
      %v602 = vpop.f32.mrb[0].mxu0
      %v603 = vadd.f32 %v523, %v602
      %v604 = vpop.f32.mrb[0].mxu0
      %605 = vmatprep.mubr.bf16.mxu0 0
      %606 = vmatmul.mubr.bf16.gmra.mrb[0].mxu0 %v547
      %v607 = vpop.f32.mrb[0].mxu0
      %v608 = vadd.f32 %v523, %v607
      %v609 = vpop.f32.mrb[0].mxu0
      %v610 = vpop.f32.mrb[0].mxu0
      %v611 = vadd.f32 %v523, %v610
      %v612 = vpop.f32.mrb[0].mxu0
      %613 = vdwg.mxu0
      %v614 = vpack.c.bf16 %v587, %v584
      %v615 = vpack.c.bf16 %v595, %v592
      %v616 = vpack.c.bf16 %v603, %v600
      %v617 = vpack.c.bf16 %v611, %v608
      %v622 = vunpack.c.l.b16 %v614
      %v623 = vunpack.c.h.b16 %v614
      %v624 = vunpack.c.l.b16 %v615
      %v625 = vunpack.c.h.b16 %v615
      %v626 = vunpack.c.l.b16 %v616
      %v627 = vunpack.c.h.b16 %v616
      %v628 = vunpack.c.l.b16 %v617
      %v629 = vunpack.c.h.b16 %v617
      %v630 = vpack.c.b16 %v622, %v622
      %v631 = vpack.c.b16 %v623, %v623
      %v632 = vpack.c.b16 %v624, %v624
      %v633 = vpack.c.b16 %v625, %v625
      %v634 = vpack.c.b16 %v626, %v626
      %v635 = vpack.c.b16 %v627, %v627
      %v636 = vpack.c.b16 %v628, %v628
      %v637 = vpack.c.b16 %v629, %v629
      %vm646 = vcmask 60416
      %647 = vst.msk [vmem:[%s343] sm:$0xf] %vm646, %v630
      %648 = vst.msk [vmem:[%s343 + $0x4] sm:$0xf] %vm646, %v631
      %649 = vst.msk [vmem:[%s343 + $0x8] sm:$0xf] %vm646, %v632
      %650 = vst.msk [vmem:[%s343 + $0xc] sm:$0xf] %vm646, %v633
      %651 = vst.msk [vmem:[%s343 + $0x10] sm:$0xf] %vm646, %v634
      %652 = vst.msk [vmem:[%s343 + $0x14] sm:$0xf] %vm646, %v635
      %653 = vst.msk [vmem:[%s343 + $0x18] sm:$0xf] %vm646, %v636
      %654 = vst.msk [vmem:[%s343 + $0x1c] sm:$0xf] %vm646, %v637
      %655 = vrot.lane.b32.xlu0 %v630, 96
      %v656 = vpop.permute.xlu0 %655
      %657 = vrot.lane.b32.xlu0 %v631, 96
      %v658 = vpop.permute.xlu0 %657
      %659 = vrot.lane.b32.xlu0 %v632, 96
      %v660 = vpop.permute.xlu0 %659
      %661 = vrot.lane.b32.xlu0 %v633, 96
      %v662 = vpop.permute.xlu0 %661
      %663 = vrot.lane.b32.xlu0 %v634, 96
      %v664 = vpop.permute.xlu0 %663
      %665 = vrot.lane.b32.xlu0 %v635, 96
      %v666 = vpop.permute.xlu0 %665
      %667 = vrot.lane.b32.xlu0 %v636, 96
      %v668 = vpop.permute.xlu0 %667
      %669 = vrot.lane.b32.xlu0 %v637, 96
      %v670 = vpop.permute.xlu0 %669
      %679 = vst.msk [vmem:[%s353] sm:$0xf] %vm646, %v656
      %680 = vst.msk [vmem:[%s353 + $0x4] sm:$0xf] %vm646, %v658
      %681 = vst.msk [vmem:[%s353 + $0x8] sm:$0xf] %vm646, %v660
      %682 = vst.msk [vmem:[%s353 + $0xc] sm:$0xf] %vm646, %v662
      %683 = vst.msk [vmem:[%s353 + $0x10] sm:$0xf] %vm646, %v664
      %684 = vst.msk [vmem:[%s353 + $0x14] sm:$0xf] %vm646, %v666
      %685 = vst.msk [vmem:[%s353 + $0x18] sm:$0xf] %vm646, %v668
      %686 = vst.msk [vmem:[%s353 + $0x1c] sm:$0xf] %vm646, %v670
      %687 = vrot.lane.b32.xlu0 %v630, 64
      %v688 = vpop.permute.xlu0 %687
      %689 = vrot.lane.b32.xlu0 %v631, 64
      %v690 = vpop.permute.xlu0 %689
      %691 = vrot.lane.b32.xlu0 %v632, 64
      %v692 = vpop.permute.xlu0 %691
      %693 = vrot.lane.b32.xlu0 %v633, 64
      %v694 = vpop.permute.xlu0 %693
      %695 = vrot.lane.b32.xlu0 %v634, 64
      %v696 = vpop.permute.xlu0 %695
      %697 = vrot.lane.b32.xlu0 %v635, 64
      %v698 = vpop.permute.xlu0 %697
      %699 = vrot.lane.b32.xlu0 %v636, 64
      %v700 = vpop.permute.xlu0 %699
      %701 = vrot.lane.b32.xlu0 %v637, 64
      %v702 = vpop.permute.xlu0 %701
      %711 = vst.msk [vmem:[%s363] sm:$0xf] %vm646, %v688
      %712 = vst.msk [vmem:[%s363 + $0x4] sm:$0xf] %vm646, %v690
      %713 = vst.msk [vmem:[%s363 + $0x8] sm:$0xf] %vm646, %v692
      %714 = vst.msk [vmem:[%s363 + $0xc] sm:$0xf] %vm646, %v694
      %715 = vst.msk [vmem:[%s363 + $0x10] sm:$0xf] %vm646, %v696
      %716 = vst.msk [vmem:[%s363 + $0x14] sm:$0xf] %vm646, %v698
      %717 = vst.msk [vmem:[%s363 + $0x18] sm:$0xf] %vm646, %v700
      %718 = vst.msk [vmem:[%s363 + $0x1c] sm:$0xf] %vm646, %v702
      %719 = vrot.lane.b32.xlu0 %v630, 120
      %v720 = vpop.permute.xlu0 %719
      %721 = vrot.lane.b32.xlu0 %v631, 120
      %v722 = vpop.permute.xlu0 %721
      %723 = vrot.lane.b32.xlu0 %v632, 120
      %v724 = vpop.permute.xlu0 %723
      %725 = vrot.lane.b32.xlu0 %v633, 120
      %v726 = vpop.permute.xlu0 %725
      %727 = vrot.lane.b32.xlu0 %v634, 120
      %v728 = vpop.permute.xlu0 %727
      %729 = vrot.lane.b32.xlu0 %v635, 120
      %v730 = vpop.permute.xlu0 %729
      %731 = vrot.lane.b32.xlu0 %v636, 120
      %v732 = vpop.permute.xlu0 %731
      %733 = vrot.lane.b32.xlu0 %v637, 120
      %v734 = vpop.permute.xlu0 %733
      %s743 = scalar_lea.vmem %s343, 32
      %744 = vst.msk [vmem:[%s743] sm:$0xf] %vm646, %v720
      %745 = vst.msk [vmem:[%s743 + $0x4] sm:$0xf] %vm646, %v722
      %746 = vst.msk [vmem:[%s743 + $0x8] sm:$0xf] %vm646, %v724
      %747 = vst.msk [vmem:[%s743 + $0xc] sm:$0xf] %vm646, %v726
      %748 = vst.msk [vmem:[%s743 + $0x10] sm:$0xf] %vm646, %v728
      %749 = vst.msk [vmem:[%s743 + $0x14] sm:$0xf] %vm646, %v730
      %750 = vst.msk [vmem:[%s743 + $0x18] sm:$0xf] %vm646, %v732
      %751 = vst.msk [vmem:[%s743 + $0x1c] sm:$0xf] %vm646, %v734
      %752 = vrot.lane.b32.xlu0 %v630, 88
      %v753 = vpop.permute.xlu0 %752
      %754 = vrot.lane.b32.xlu0 %v631, 88
      %v755 = vpop.permute.xlu0 %754
      %756 = vrot.lane.b32.xlu0 %v632, 88
      %v757 = vpop.permute.xlu0 %756
      %758 = vrot.lane.b32.xlu0 %v633, 88
      %v759 = vpop.permute.xlu0 %758
      %760 = vrot.lane.b32.xlu0 %v634, 88
      %v761 = vpop.permute.xlu0 %760
      %762 = vrot.lane.b32.xlu0 %v635, 88
      %v763 = vpop.permute.xlu0 %762
      %764 = vrot.lane.b32.xlu0 %v636, 88
      %v765 = vpop.permute.xlu0 %764
      %766 = vrot.lane.b32.xlu0 %v637, 88
      %v767 = vpop.permute.xlu0 %766
      %s776 = scalar_lea.vmem %s353, 32
      %777 = vst.msk [vmem:[%s776] sm:$0xf] %vm646, %v753
      %778 = vst.msk [vmem:[%s776 + $0x4] sm:$0xf] %vm646, %v755
      %779 = vst.msk [vmem:[%s776 + $0x8] sm:$0xf] %vm646, %v757
      %780 = vst.msk [vmem:[%s776 + $0xc] sm:$0xf] %vm646, %v759
      %781 = vst.msk [vmem:[%s776 + $0x10] sm:$0xf] %vm646, %v761
      %782 = vst.msk [vmem:[%s776 + $0x14] sm:$0xf] %vm646, %v763
      %783 = vst.msk [vmem:[%s776 + $0x18] sm:$0xf] %vm646, %v765
      %784 = vst.msk [vmem:[%s776 + $0x1c] sm:$0xf] %vm646, %v767
      %785 = vrot.lane.b32.xlu0 %v630, 56
      %v786 = vpop.permute.xlu0 %785
      %787 = vrot.lane.b32.xlu0 %v631, 56
      %v788 = vpop.permute.xlu0 %787
      %789 = vrot.lane.b32.xlu0 %v632, 56
      %v790 = vpop.permute.xlu0 %789
      %791 = vrot.lane.b32.xlu0 %v633, 56
      %v792 = vpop.permute.xlu0 %791
      %793 = vrot.lane.b32.xlu0 %v634, 56
      %v794 = vpop.permute.xlu0 %793
      %795 = vrot.lane.b32.xlu0 %v635, 56
      %v796 = vpop.permute.xlu0 %795
      %797 = vrot.lane.b32.xlu0 %v636, 56
      %v798 = vpop.permute.xlu0 %797
      %799 = vrot.lane.b32.xlu0 %v637, 56
      %v800 = vpop.permute.xlu0 %799
      %s809 = scalar_lea.vmem %s363, 32
      %810 = vst.msk [vmem:[%s809] sm:$0xf] %vm646, %v786
      %811 = vst.msk [vmem:[%s809 + $0x4] sm:$0xf] %vm646, %v788
      %812 = vst.msk [vmem:[%s809 + $0x8] sm:$0xf] %vm646, %v790
      %813 = vst.msk [vmem:[%s809 + $0xc] sm:$0xf] %vm646, %v792
      %814 = vst.msk [vmem:[%s809 + $0x10] sm:$0xf] %vm646, %v794
      %815 = vst.msk [vmem:[%s809 + $0x14] sm:$0xf] %vm646, %v796
      %816 = vst.msk [vmem:[%s809 + $0x18] sm:$0xf] %vm646, %v798
      %817 = vst.msk [vmem:[%s809 + $0x1c] sm:$0xf] %vm646, %v800
      %818 = vrot.lane.b32.xlu0 %v630, 112
      %v819 = vpop.permute.xlu0 %818
      %820 = vrot.lane.b32.xlu0 %v631, 112
      %v821 = vpop.permute.xlu0 %820
      %822 = vrot.lane.b32.xlu0 %v632, 112
      %v823 = vpop.permute.xlu0 %822
      %824 = vrot.lane.b32.xlu0 %v633, 112
      %v825 = vpop.permute.xlu0 %824
      %826 = vrot.lane.b32.xlu0 %v634, 112
      %v827 = vpop.permute.xlu0 %826
      %828 = vrot.lane.b32.xlu0 %v635, 112
      %v829 = vpop.permute.xlu0 %828
      %830 = vrot.lane.b32.xlu0 %v636, 112
      %v831 = vpop.permute.xlu0 %830
      %832 = vrot.lane.b32.xlu0 %v637, 112
      %v833 = vpop.permute.xlu0 %832
      %s842 = scalar_lea.vmem %s343, 64
      %843 = vst.msk [vmem:[%s842] sm:$0xf] %vm646, %v819
      %844 = vst.msk [vmem:[%s842 + $0x4] sm:$0xf] %vm646, %v821
      %845 = vst.msk [vmem:[%s842 + $0x8] sm:$0xf] %vm646, %v823
      %846 = vst.msk [vmem:[%s842 + $0xc] sm:$0xf] %vm646, %v825
      %847 = vst.msk [vmem:[%s842 + $0x10] sm:$0xf] %vm646, %v827
      %848 = vst.msk [vmem:[%s842 + $0x14] sm:$0xf] %vm646, %v829
      %849 = vst.msk [vmem:[%s842 + $0x18] sm:$0xf] %vm646, %v831
      %850 = vst.msk [vmem:[%s842 + $0x1c] sm:$0xf] %vm646, %v833
      %851 = vrot.lane.b32.xlu0 %v630, 80
      %v852 = vpop.permute.xlu0 %851
      %853 = vrot.lane.b32.xlu0 %v631, 80
      %v854 = vpop.permute.xlu0 %853
      %855 = vrot.lane.b32.xlu0 %v632, 80
      %v856 = vpop.permute.xlu0 %855
      %857 = vrot.lane.b32.xlu0 %v633, 80
      %v858 = vpop.permute.xlu0 %857
      %859 = vrot.lane.b32.xlu0 %v634, 80
      %v860 = vpop.permute.xlu0 %859
      %861 = vrot.lane.b32.xlu0 %v635, 80
      %v862 = vpop.permute.xlu0 %861
      %863 = vrot.lane.b32.xlu0 %v636, 80
      %v864 = vpop.permute.xlu0 %863
      %865 = vrot.lane.b32.xlu0 %v637, 80
      %v866 = vpop.permute.xlu0 %865
      %s875 = scalar_lea.vmem %s353, 64
      %876 = vst.msk [vmem:[%s875] sm:$0xf] %vm646, %v852
      %877 = vst.msk [vmem:[%s875 + $0x4] sm:$0xf] %vm646, %v854
      %878 = vst.msk [vmem:[%s875 + $0x8] sm:$0xf] %vm646, %v856
      %879 = vst.msk [vmem:[%s875 + $0xc] sm:$0xf] %vm646, %v858
      %880 = vst.msk [vmem:[%s875 + $0x10] sm:$0xf] %vm646, %v860
      %881 = vst.msk [vmem:[%s875 + $0x14] sm:$0xf] %vm646, %v862
      %882 = vst.msk [vmem:[%s875 + $0x18] sm:$0xf] %vm646, %v864
      %883 = vst.msk [vmem:[%s875 + $0x1c] sm:$0xf] %vm646, %v866
      %884 = vrot.lane.b32.xlu0 %v630, 48
      %v885 = vpop.permute.xlu0 %884
      %886 = vrot.lane.b32.xlu0 %v631, 48
      %v887 = vpop.permute.xlu0 %886
      %888 = vrot.lane.b32.xlu0 %v632, 48
      %v889 = vpop.permute.xlu0 %888
      %890 = vrot.lane.b32.xlu0 %v633, 48
      %v891 = vpop.permute.xlu0 %890
      %892 = vrot.lane.b32.xlu0 %v634, 48
      %v893 = vpop.permute.xlu0 %892
      %894 = vrot.lane.b32.xlu0 %v635, 48
      %v895 = vpop.permute.xlu0 %894
      %896 = vrot.lane.b32.xlu0 %v636, 48
      %v897 = vpop.permute.xlu0 %896
      %898 = vrot.lane.b32.xlu0 %v637, 48
      %v899 = vpop.permute.xlu0 %898
      %s908 = scalar_lea.vmem %s363, 64
      %909 = vst.msk [vmem:[%s908] sm:$0xf] %vm646, %v885
      %910 = vst.msk [vmem:[%s908 + $0x4] sm:$0xf] %vm646, %v887
      %911 = vst.msk [vmem:[%s908 + $0x8] sm:$0xf] %vm646, %v889
      %912 = vst.msk [vmem:[%s908 + $0xc] sm:$0xf] %vm646, %v891
      %913 = vst.msk [vmem:[%s908 + $0x10] sm:$0xf] %vm646, %v893
      %914 = vst.msk [vmem:[%s908 + $0x14] sm:$0xf] %vm646, %v895
      %915 = vst.msk [vmem:[%s908 + $0x18] sm:$0xf] %vm646, %v897
      %916 = vst.msk [vmem:[%s908 + $0x1c] sm:$0xf] %vm646, %v899
      %917 = vrot.lane.b32.xlu0 %v630, 104
      %v918 = vpop.permute.xlu0 %917
      %919 = vrot.lane.b32.xlu0 %v631, 104
      %v920 = vpop.permute.xlu0 %919
      %921 = vrot.lane.b32.xlu0 %v632, 104
      %v922 = vpop.permute.xlu0 %921
      %923 = vrot.lane.b32.xlu0 %v633, 104
      %v924 = vpop.permute.xlu0 %923
      %925 = vrot.lane.b32.xlu0 %v634, 104
      %v926 = vpop.permute.xlu0 %925
      %927 = vrot.lane.b32.xlu0 %v635, 104
      %v928 = vpop.permute.xlu0 %927
      %929 = vrot.lane.b32.xlu0 %v636, 104
      %v930 = vpop.permute.xlu0 %929
      %931 = vrot.lane.b32.xlu0 %v637, 104
      %v932 = vpop.permute.xlu0 %931
      %s941 = scalar_lea.vmem %s343, 96
      %942 = vst.msk [vmem:[%s941] sm:$0xf] %vm646, %v918
      %943 = vst.msk [vmem:[%s941 + $0x4] sm:$0xf] %vm646, %v920
      %944 = vst.msk [vmem:[%s941 + $0x8] sm:$0xf] %vm646, %v922
      %945 = vst.msk [vmem:[%s941 + $0xc] sm:$0xf] %vm646, %v924
      %946 = vst.msk [vmem:[%s941 + $0x10] sm:$0xf] %vm646, %v926
      %947 = vst.msk [vmem:[%s941 + $0x14] sm:$0xf] %vm646, %v928
      %948 = vst.msk [vmem:[%s941 + $0x18] sm:$0xf] %vm646, %v930
      %949 = vst.msk [vmem:[%s941 + $0x1c] sm:$0xf] %vm646, %v932
      %950 = vrot.lane.b32.xlu0 %v630, 72
      %v951 = vpop.permute.xlu0 %950
      %952 = vrot.lane.b32.xlu0 %v631, 72
      %v953 = vpop.permute.xlu0 %952
      %954 = vrot.lane.b32.xlu0 %v632, 72
      %v955 = vpop.permute.xlu0 %954
      %956 = vrot.lane.b32.xlu0 %v633, 72
      %v957 = vpop.permute.xlu0 %956
      %958 = vrot.lane.b32.xlu0 %v634, 72
      %v959 = vpop.permute.xlu0 %958
      %960 = vrot.lane.b32.xlu0 %v635, 72
      %v961 = vpop.permute.xlu0 %960
      %962 = vrot.lane.b32.xlu0 %v636, 72
      %v963 = vpop.permute.xlu0 %962
      %964 = vrot.lane.b32.xlu0 %v637, 72
      %v965 = vpop.permute.xlu0 %964
      %s974 = scalar_lea.vmem %s353, 96
      %975 = vst.msk [vmem:[%s974] sm:$0xf] %vm646, %v951
      %976 = vst.msk [vmem:[%s974 + $0x4] sm:$0xf] %vm646, %v953
      %977 = vst.msk [vmem:[%s974 + $0x8] sm:$0xf] %vm646, %v955
      %978 = vst.msk [vmem:[%s974 + $0xc] sm:$0xf] %vm646, %v957
      %979 = vst.msk [vmem:[%s974 + $0x10] sm:$0xf] %vm646, %v959
      %980 = vst.msk [vmem:[%s974 + $0x14] sm:$0xf] %vm646, %v961
      %981 = vst.msk [vmem:[%s974 + $0x18] sm:$0xf] %vm646, %v963
      %982 = vst.msk [vmem:[%s974 + $0x1c] sm:$0xf] %vm646, %v965
      %983 = vrot.lane.b32.xlu0 %v630, 40
      %v984 = vpop.permute.xlu0 %983
      %985 = vrot.lane.b32.xlu0 %v631, 40
      %v986 = vpop.permute.xlu0 %985
      %987 = vrot.lane.b32.xlu0 %v632, 40
      %v988 = vpop.permute.xlu0 %987
      %989 = vrot.lane.b32.xlu0 %v633, 40
      %v990 = vpop.permute.xlu0 %989
      %991 = vrot.lane.b32.xlu0 %v634, 40
      %v992 = vpop.permute.xlu0 %991
      %993 = vrot.lane.b32.xlu0 %v635, 40
      %v994 = vpop.permute.xlu0 %993
      %995 = vrot.lane.b32.xlu0 %v636, 40
      %v996 = vpop.permute.xlu0 %995
      %997 = vrot.lane.b32.xlu0 %v637, 40
      %v998 = vpop.permute.xlu0 %997
      %s1007 = scalar_lea.vmem %s363, 96
      %1008 = vst.msk [vmem:[%s1007] sm:$0xf] %vm646, %v984
      %1009 = vst.msk [vmem:[%s1007 + $0x4] sm:$0xf] %vm646, %v986
      %1010 = vst.msk [vmem:[%s1007 + $0x8] sm:$0xf] %vm646, %v988
      %1011 = vst.msk [vmem:[%s1007 + $0xc] sm:$0xf] %vm646, %v990
      %1012 = vst.msk [vmem:[%s1007 + $0x10] sm:$0xf] %vm646, %v992
      %1013 = vst.msk [vmem:[%s1007 + $0x14] sm:$0xf] %vm646, %v994
      %1014 = vst.msk [vmem:[%s1007 + $0x18] sm:$0xf] %vm646, %v996
      %1015 = vst.msk [vmem:[%s1007 + $0x1c] sm:$0xf] %vm646, %v998
      %s1016 = smul.u32 8, %s24
      %p1017 = scmp.lt.s32.totalorder %s23, 1
      %s1018 = scalar_select %p1017, %s23, 1
      %p1019 = scmp.lt.s32.totalorder %s1016, 7
      %s1020 = scalar_select %p1019, %s1016, 7
      %s1021 = smul.addr %s1018, 32
      %s1022 = sadd.s32 %s1020, %s1021
      %s1023 = smul.addr %s1022, 4
      %s1024 = scalar_lea.vmem %s5, %s1023
      %s1025 = smul.u32 8, %s24
      %p1026 = scmp.lt.s32.totalorder %s23, 1
      %s1027 = scalar_select %p1026, %s23, 1
      %p1028 = scmp.lt.s32.totalorder %s1025, 7
      %s1029 = scalar_select %p1028, %s1025, 7
      %s1030 = smul.addr %s1027, 32
      %s1031 = sadd.s32 %s1029, %s1030
      %s1032 = smul.addr %s1031, 4
      %s1033 = scalar_lea.vmem %s6, %s1032
      %s1034 = smul.u32 8, %s24
      %p1035 = scmp.lt.s32.totalorder %s23, 1
      %s1036 = scalar_select %p1035, %s23, 1
      %p1037 = scmp.lt.s32.totalorder %s1034, 7
      %s1038 = scalar_select %p1037, %s1034, 7
      %s1039 = smul.addr %s1036, 32
      %s1040 = sadd.s32 %s1038, %s1039
      %s1041 = smul.addr %s1040, 4
      %s1042 = scalar_lea.vmem %s7, %s1041
      // Predicated region
      $region41: #{tpu_custom_call.1} parent=39 // pred_check
        %p1043 = pneg %p163
      $region42: #{tpu_custom_call.1} parent=39 // pred_check_branch
        %1045 = sbr.rel (%p1043) target = $region44
      $region43: #{tpu_custom_call.1} parent=39 // pred_region
        %s1046 = smul.u32 8, %s24
      $region44: #{tpu_custom_call.1} parent=39 // pred_fallthru
        _
      // Predicated region
      $region45: #{tpu_custom_call.1} parent=39 // pred_check
        %p1047 = pneg %p191
      $region46: #{tpu_custom_call.1} parent=39 // pred_check_branch
        %1049 = sbr.rel (%p1047) target = $region48
      $region47: #{tpu_custom_call.1} parent=39 // pred_region
        %s1050 = smul.u32 8, %s24
      $region48: #{tpu_custom_call.1} parent=39 // pred_fallthru
        _
      // Predicated region
      $region49: #{tpu_custom_call.1} parent=39 // pred_check
        %p1051 = pneg %p219
      $region50: #{tpu_custom_call.1} parent=39 // pred_check_branch
        %1053 = sbr.rel (%p1051) target = $region52
      $region51: #{tpu_custom_call.1} parent=39 // pred_region
        %s1054 = smul.u32 8, %s24
      $region52: #{tpu_custom_call.1} parent=39 // pred_fallthru
        _
    $region40: #{tpu_custom_call.1} parent=5 // pred_fallthru
      _
    %p1055 = scmp.le.s32.totalorder 2, %s14
    // Predicated region
    $region53: #{tpu_custom_call.1} parent=5 // pred_check
      %p1056 = pneg %p1055
    $region54: #{tpu_custom_call.1} parent=5 // pred_check_branch
      %1058 = sbr.rel (%p1056) target = $region56
    $region55: #{tpu_custom_call.1} parent=5 // pred_region
      %s1059 = ssub.s32 %s14, 2
      // Predicated region
      $region57: #{tpu_custom_call.1} parent=55 // pred_check
        %p1060 = pneg %p169
      $region58: #{tpu_custom_call.1} parent=55 // pred_check_branch
        %1062 = sbr.rel (%p1060) target = $region60
      $region59: #{tpu_custom_call.1} parent=55 // pred_region
        %s1063 = smul.u32 8, %s26
        %p1064 = scmp.lt.s32.totalorder %s25, 1
        %s1065 = scalar_select %p1064, %s25, 1
        %p1066 = scmp.lt.s32.totalorder %s1063, 7
        %s1067 = scalar_select %p1066, %s1063, 7
        %s1068 = smul.addr %s1065, 32
        %s1069 = sadd.s32 %s1067, %s1068
        %s1070 = smul.addr %s1069, 4
        %s1071 = scalar_lea.vmem %s5, %s1070
      $region60: #{tpu_custom_call.1} parent=55 // pred_fallthru
        _
      // Predicated region
      $region61: #{tpu_custom_call.1} parent=55 // pred_check
        %p1072 = pneg %p197
      $region62: #{tpu_custom_call.1} parent=55 // pred_check_branch
        %1074 = sbr.rel (%p1072) target = $region64
      $region63: #{tpu_custom_call.1} parent=55 // pred_region
        %s1075 = smul.u32 8, %s26
        %p1076 = scmp.lt.s32.totalorder %s25, 1
        %s1077 = scalar_select %p1076, %s25, 1
        %p1078 = scmp.lt.s32.totalorder %s1075, 7
        %s1079 = scalar_select %p1078, %s1075, 7
        %s1080 = smul.addr %s1077, 32
        %s1081 = sadd.s32 %s1079, %s1080
        %s1082 = smul.addr %s1081, 4
        %s1083 = scalar_lea.vmem %s6, %s1082
      $region64: #{tpu_custom_call.1} parent=55 // pred_fallthru
        _
      // Predicated region
      $region65: #{tpu_custom_call.1} parent=55 // pred_check
        %p1084 = pneg %p225
      $region66: #{tpu_custom_call.1} parent=55 // pred_check_branch
        %1086 = sbr.rel (%p1084) target = $region68
      $region67: #{tpu_custom_call.1} parent=55 // pred_region
        %s1087 = smul.u32 8, %s26
        %p1088 = scmp.lt.s32.totalorder %s25, 1
        %s1089 = scalar_select %p1088, %s25, 1
        %p1090 = scmp.lt.s32.totalorder %s1087, 7
        %s1091 = scalar_select %p1090, %s1087, 7
        %s1092 = smul.addr %s1089, 32
        %s1093 = sadd.s32 %s1091, %s1092
        %s1094 = smul.addr %s1093, 4
        %s1095 = scalar_lea.vmem %s7, %s1094
      $region68: #{tpu_custom_call.1} parent=55 // pred_fallthru
        _
    $region56: #{tpu_custom_call.1} parent=5 // pred_fallthru
      _
  $region6: #{tpu_custom_call.1} parent=0 // loop_footer
    %s18 = sadd.s32 1, %s14
  $region7: #{tpu_custom_call.1} parent=0 // loop_footer_branch
    %13 = sbr.rel target = $region3
  $region8: #{tpu_custom_call.1} parent=0 // loop_exit
    _

// kernel: tpu_custom_call.1
$region0: #{tpu_custom_call.1}
  #allocation0 [shape = 'u32[]', space=smem, size = 0x4, offset = 0x4, fixed_abs, tag = 'smem constant byte address 0x4 - core index']
  #allocation1 [shape = 'u32[144,128]{1,0:T(1,128)}', space=vmem, size = 0x12000, scoped, tag = 'internal scratch']
  %s0 = inlined_call_operand.vmem [shape: f32[2,64,32], index: 0, kind: input, shape index: {}]
  %s1 = inlined_call_operand.vmem [shape: f32[1,32], index: 1, kind: input, shape index: {}]
  %s2 = inlined_call_operand.vmem [shape: f32[1,32], index: 2, kind: input, shape index: {}]
  %s3 = inlined_call_operand.vmem [shape: bf16[32,96], index: 3, kind: input, shape index: {}]
  %s4 = inlined_call_operand.vmem [shape: f32[1,96], index: 4, kind: input, shape index: {}]
  %s5 = inlined_call_operand.vmem [shape: bf16[2,4,64,8], index: 5, kind: output, shape index: {0}]
  %s6 = inlined_call_operand.vmem [shape: bf16[2,4,64,8], index: 6, kind: output, shape index: {1}]
  %s7 = inlined_call_operand.vmem [shape: bf16[2,4,64,8], index: 7, kind: output, shape index: {2}]
  %8 = xla_tuple %s5, %s6, %s7
  %s9 = sld [smem:[#allocation0]]
  $region69: #{tpu_custom_call.1} parent=0
    _
  %s11 = ssub.s32 1, %s9
  %s12 = scalar_select 0, %s11, %s9
  loop: start=0, step=1, limit=4
  $region2: #{tpu_custom_call.1} parent=0 // loop_pre_header
    _
  $region3: #{tpu_custom_call.1} parent=0 // loop_header
    %s14 = sphi 0, %s18
    %p15 = scmp.ge.s32.totalorder %s14, 4
    %s21 = sphi 0, %s33
    %s22 = sphi 0, %s29
    %s23 = sphi 0, %s21
    %s24 = sphi 0, %s22
    %s25 = sphi 0, %s23
    %s26 = sphi 0, %s24
    %s38 = sphi 0, %s40
    %s41 = sphi 0, %s38
    %s42 = sphi 0, %s41
    %s58 = sphi 0, %s42
    %s62 = sphi 0, %s62
    %s64 = sphi 0, %s62
    %s65 = sphi 0, %s64
    %s79 = sphi 0, %s65
    %s83 = sphi 0, %s83
    %s85 = sphi 0, %s83
    %s86 = sphi 0, %s85
    %s100 = sphi 0, %s86
    %s104 = sphi 0, %s104
    %s106 = sphi 0, %s104
    %s107 = sphi 0, %s106
    %s121 = sphi 0, %s107
    %s125 = sphi 0, %s125
    %s127 = sphi 0, %s125
    %s128 = sphi 0, %s127
    %s142 = sphi 0, %s128
    %s150 = sphi 0, %s152
    %s153 = sphi 0, %s150
    %s154 = sphi 0, %s153
    %s170 = sphi 0, %s154
    %s178 = sphi 0, %s180
    %s181 = sphi 0, %s178
    %s182 = sphi 0, %s181
    %s198 = sphi 0, %s182
    %s206 = sphi 0, %s208
    %s209 = sphi 0, %s206
    %s210 = sphi 0, %s209
    %s226 = sphi 0, %s210
  $region4: #{tpu_custom_call.1} parent=0 // loop_header_branch
    %17 = sbr.rel (%p15) target = $region8
  $region5: #{tpu_custom_call.1} parent=0 // loop_body
    %s19 = ssub.s32 %s14, 1
    %s20 = ssub.s32 %s14, 2
    %s27 = sadd.s32 1, %s22
    %p28 = scmp.ge.s32.totalorder %s27, 1
    %s29 = scalar_select %p28, 0, %s27
    %s30 = sadd.s32 1, %s21
    %s31 = scalar_select %p28, %s30, %s21
    %p32 = scmp.ge.s32.totalorder %s31, 2
    %s33 = scalar_select %p32, 0, %s31
    %s34 = ssub.s32 %s21, %s33
    %s35 = ssub.s32 %s22, %s29
    %s36 = sor.u32 %s34, %s35
    %p37 = scmp.eq.s32.totalorder %s36, 0
    %s39 = sadd.s32 %s38, 1
    %s40 = scalar_select %p37, %s38, %s39
    %p43 = pneg %p37
    %p44 = scmp.eq.s32.totalorder %s14, 1
    %p45 = por %p43, %p44
    %p46 = scmp.ne.s32.totalorder %s38, %s41
    %p47 = scmp.eq.s32.totalorder %s14, 0
    %p48 = por %p46, %p47
    %p49 = scmp.ne.s32.totalorder %s38, %s41
    %p50 = scmp.eq.s32.totalorder %s19, 1
    %p51 = por %p49, %p50
    %p52 = scmp.ne.s32.totalorder %s41, %s42
    %p53 = scmp.eq.s32.totalorder %s19, 0
    %p54 = por %p52, %p53
    %p55 = scmp.ne.s32.totalorder %s41, %s42
    %p56 = scmp.eq.s32.totalorder %s20, 1
    %p57 = por %p55, %p56
    %p59 = scmp.ne.s32.totalorder %s42, %s58
    %p60 = scmp.eq.s32.totalorder %s20, 0
    %p61 = por %p59, %p60
    %s63 = sadd.s32 %s62, 1
    %p66 = scmp.eq.s32.totalorder %s14, 1
    %p67 = scmp.ne.s32.totalorder %s62, %s64
    %p68 = scmp.eq.s32.totalorder %s14, 0
    %p69 = por %p67, %p68
    %p70 = scmp.ne.s32.totalorder %s62, %s64
    %p71 = scmp.eq.s32.totalorder %s19, 1
    %p72 = por %p70, %p71
    %p73 = scmp.ne.s32.totalorder %s64, %s65
    %p74 = scmp.eq.s32.totalorder %s19, 0
    %p75 = por %p73, %p74
    %p76 = scmp.ne.s32.totalorder %s64, %s65
    %p77 = scmp.eq.s32.totalorder %s20, 1
    %p78 = por %p76, %p77
    %p80 = scmp.ne.s32.totalorder %s65, %s79
    %p81 = scmp.eq.s32.totalorder %s20, 0
    %p82 = por %p80, %p81
    %s84 = sadd.s32 %s83, 1
    %p87 = scmp.eq.s32.totalorder %s14, 1
    %p88 = scmp.ne.s32.totalorder %s83, %s85
    %p89 = scmp.eq.s32.totalorder %s14, 0
    %p90 = por %p88, %p89
    %p91 = scmp.ne.s32.totalorder %s83, %s85
    %p92 = scmp.eq.s32.totalorder %s19, 1
    %p93 = por %p91, %p92
    %p94 = scmp.ne.s32.totalorder %s85, %s86
    %p95 = scmp.eq.s32.totalorder %s19, 0
    %p96 = por %p94, %p95
    %p97 = scmp.ne.s32.totalorder %s85, %s86
    %p98 = scmp.eq.s32.totalorder %s20, 1
    %p99 = por %p97, %p98
    %p101 = scmp.ne.s32.totalorder %s86, %s100
    %p102 = scmp.eq.s32.totalorder %s20, 0
    %p103 = por %p101, %p102
    %s105 = sadd.s32 %s104, 1
    %p108 = scmp.eq.s32.totalorder %s14, 1
    %p109 = scmp.ne.s32.totalorder %s104, %s106
    %p110 = scmp.eq.s32.totalorder %s14, 0
    %p111 = por %p109, %p110
    %p112 = scmp.ne.s32.totalorder %s104, %s106
    %p113 = scmp.eq.s32.totalorder %s19, 1
    %p114 = por %p112, %p113
    %p115 = scmp.ne.s32.totalorder %s106, %s107
    %p116 = scmp.eq.s32.totalorder %s19, 0
    %p117 = por %p115, %p116
    %p118 = scmp.ne.s32.totalorder %s106, %s107
    %p119 = scmp.eq.s32.totalorder %s20, 1
    %p120 = por %p118, %p119
    %p122 = scmp.ne.s32.totalorder %s107, %s121
    %p123 = scmp.eq.s32.totalorder %s20, 0
    %p124 = por %p122, %p123
    %s126 = sadd.s32 %s125, 1
    %p129 = scmp.eq.s32.totalorder %s14, 1
    %p130 = scmp.ne.s32.totalorder %s125, %s127
    %p131 = scmp.eq.s32.totalorder %s14, 0
    %p132 = por %p130, %p131
    %p133 = scmp.ne.s32.totalorder %s125, %s127
    %p134 = scmp.eq.s32.totalorder %s19, 1
    %p135 = por %p133, %p134
    %p136 = scmp.ne.s32.totalorder %s127, %s128
    %p137 = scmp.eq.s32.totalorder %s19, 0
    %p138 = por %p136, %p137
    %p139 = scmp.ne.s32.totalorder %s127, %s128
    %p140 = scmp.eq.s32.totalorder %s20, 1
    %p141 = por %p139, %p140
    %p143 = scmp.ne.s32.totalorder %s128, %s142
    %p144 = scmp.eq.s32.totalorder %s20, 0
    %p145 = por %p143, %p144
    %s146 = ssub.s32 %s21, %s33
    %s147 = ssub.s32 %s22, %s29
    %s148 = sor.u32 %s146, %s147
    %p149 = scmp.eq.s32.totalorder %s148, 0
    %s151 = sadd.s32 %s150, 1
    %s152 = scalar_select %p149, %s150, %s151
    %p155 = pneg %p149
    %p156 = scmp.eq.s32.totalorder %s14, 1
    %p157 = por %p155, %p156
    %p158 = scmp.ne.s32.totalorder %s150, %s153
    %p159 = scmp.eq.s32.totalorder %s14, 0
    %p160 = por %p158, %p159
    %p161 = scmp.ne.s32.totalorder %s150, %s153
    %p162 = scmp.eq.s32.totalorder %s19, 1
    %p163 = por %p161, %p162
    %p164 = scmp.ne.s32.totalorder %s153, %s154
    %p165 = scmp.eq.s32.totalorder %s19, 0
    %p166 = por %p164, %p165
    %p167 = scmp.ne.s32.totalorder %s153, %s154
    %p168 = scmp.eq.s32.totalorder %s20, 1
    %p169 = por %p167, %p168
    %p171 = scmp.ne.s32.totalorder %s154, %s170
    %p172 = scmp.eq.s32.totalorder %s20, 0
    %p173 = por %p171, %p172
    %s174 = ssub.s32 %s21, %s33
    %s175 = ssub.s32 %s22, %s29
    %s176 = sor.u32 %s174, %s175
    %p177 = scmp.eq.s32.totalorder %s176, 0
    %s179 = sadd.s32 %s178, 1
    %s180 = scalar_select %p177, %s178, %s179
    %p183 = pneg %p177
    %p184 = scmp.eq.s32.totalorder %s14, 1
    %p185 = por %p183, %p184
    %p186 = scmp.ne.s32.totalorder %s178, %s181
    %p187 = scmp.eq.s32.totalorder %s14, 0
    %p188 = por %p186, %p187
    %p189 = scmp.ne.s32.totalorder %s178, %s181
    %p190 = scmp.eq.s32.totalorder %s19, 1
    %p191 = por %p189, %p190
    %p192 = scmp.ne.s32.totalorder %s181, %s182
    %p193 = scmp.eq.s32.totalorder %s19, 0
    %p194 = por %p192, %p193
    %p195 = scmp.ne.s32.totalorder %s181, %s182
    %p196 = scmp.eq.s32.totalorder %s20, 1
    %p197 = por %p195, %p196
    %p199 = scmp.ne.s32.totalorder %s182, %s198
    %p200 = scmp.eq.s32.totalorder %s20, 0
    %p201 = por %p199, %p200
    %s202 = ssub.s32 %s21, %s33
    %s203 = ssub.s32 %s22, %s29
    %s204 = sor.u32 %s202, %s203
    %p205 = scmp.eq.s32.totalorder %s204, 0
    %s207 = sadd.s32 %s206, 1
    %s208 = scalar_select %p205, %s206, %s207
    %p211 = pneg %p205
    %p212 = scmp.eq.s32.totalorder %s14, 1
    %p213 = por %p211, %p212
    %p214 = scmp.ne.s32.totalorder %s206, %s209
    %p215 = scmp.eq.s32.totalorder %s14, 0
    %p216 = por %p214, %p215
    %p217 = scmp.ne.s32.totalorder %s206, %s209
    %p218 = scmp.eq.s32.totalorder %s19, 1
    %p219 = por %p217, %p218
    %p220 = scmp.ne.s32.totalorder %s209, %s210
    %p221 = scmp.eq.s32.totalorder %s19, 0
    %p222 = por %p220, %p221
    %p223 = scmp.ne.s32.totalorder %s209, %s210
    %p224 = scmp.eq.s32.totalorder %s20, 1
    %p225 = por %p223, %p224
    %p227 = scmp.ne.s32.totalorder %s210, %s226
    %p228 = scmp.eq.s32.totalorder %s20, 0
    %p229 = por %p227, %p228
    %p230 = scmp.le.s32.totalorder 1, %s14
    %p231 = scmp.lt.s32.totalorder %s14, 3
    %p232 = pnand %p230, %p231
    %p233 = pneg %p232
    // Predicated region
    $region9: #{tpu_custom_call.1} parent=5 // pred_check
      _
    $region10: #{tpu_custom_call.1} parent=5 // pred_check_branch
      %235 = sbr.rel (%p232) target = $region12
    $region11: #{tpu_custom_call.1} parent=5 // pred_region
      %s236 = ssub.s32 %s14, 1
      // Predicated region
      $region13: #{tpu_custom_call.1} parent=11 // pred_check
        %p237 = pneg %p75
      $region14: #{tpu_custom_call.1} parent=11 // pred_check_branch
        %239 = sbr.rel (%p237) target = $region16
      $region15: #{tpu_custom_call.1} parent=11 // pred_region
        _
      $region16: #{tpu_custom_call.1} parent=11 // pred_fallthru
        _
      // Predicated region
      $region17: #{tpu_custom_call.1} parent=11 // pred_check
        %p240 = pneg %p96
      $region18: #{tpu_custom_call.1} parent=11 // pred_check_branch
        %242 = sbr.rel (%p240) target = $region20
      $region19: #{tpu_custom_call.1} parent=11 // pred_region
        _
      $region20: #{tpu_custom_call.1} parent=11 // pred_fallthru
        _
      // Predicated region
      $region21: #{tpu_custom_call.1} parent=11 // pred_check
        %p243 = pneg %p117
      $region22: #{tpu_custom_call.1} parent=11 // pred_check_branch
        %245 = sbr.rel (%p243) target = $region24
      $region23: #{tpu_custom_call.1} parent=11 // pred_region
        _
      $region24: #{tpu_custom_call.1} parent=11 // pred_fallthru
        _
      // Predicated region
      $region25: #{tpu_custom_call.1} parent=11 // pred_check
        %p246 = pneg %p138
      $region26: #{tpu_custom_call.1} parent=11 // pred_check_branch
        %248 = sbr.rel (%p246) target = $region28
      $region27: #{tpu_custom_call.1} parent=11 // pred_region
        _
      $region28: #{tpu_custom_call.1} parent=11 // pred_fallthru
        _
    $region12: #{tpu_custom_call.1} parent=5 // pred_fallthru
      _
    %p249 = scmp.lt.s32.totalorder %s14, 2
    // Predicated region
    $region29: #{tpu_custom_call.1} parent=5 // pred_check
      %p250 = pneg %p249
    $region30: #{tpu_custom_call.1} parent=5 // pred_check_branch
      %252 = sbr.rel (%p250) target = $region32
    $region31: #{tpu_custom_call.1} parent=5 // pred_region
      // Predicated region
      $region33: #{tpu_custom_call.1} parent=31 // pred_check
        %p253 = pneg %p48
      $region34: #{tpu_custom_call.1} parent=31 // pred_check_branch
        %255 = sbr.rel (%p253) target = $region36
      $region35: #{tpu_custom_call.1} parent=31 // pred_region
        %s256 = smul.u32 8, %s22
        %p257 = scmp.lt.s32.totalorder %s21, 1
        %s258 = scalar_select %p257, %s21, 1
        %p259 = scmp.lt.s32.totalorder %s256, 7
        %s260 = scalar_select %p259, %s256, 7
        %s261 = smul.addr %s258, 8
        %s262 = sadd.s32 %s260, %s261
        %s263 = smul.addr %s262, 8
        %s264 = scalar_lea.vmem %s0, %s263
        %s265 = smul.u32 8, %s22
      $region36: #{tpu_custom_call.1} parent=31 // pred_fallthru
        _
    $region32: #{tpu_custom_call.1} parent=5 // pred_fallthru
      _
    %p266 = scmp.le.s32.totalorder 1, %s14
    %p267 = scmp.lt.s32.totalorder %s14, 3
    %p268 = pnand %p266, %p267
    %p269 = pneg %p268
    // Predicated region
    $region37: #{tpu_custom_call.1} parent=5 // pred_check
      _
    $region38: #{tpu_custom_call.1} parent=5 // pred_check_branch
      %271 = sbr.rel (%p268) target = $region40
    $region39: #{tpu_custom_call.1} parent=5 // pred_region
      %s272 = ssub.s32 %s14, 1
      %s273 = smul.u32 8, %s24
      %p274 = scmp.lt.s32.totalorder %s23, 1
      %s275 = scalar_select %p274, %s23, 1
      %p276 = scmp.lt.s32.totalorder %s273, 7
      %s277 = scalar_select %p276, %s273, 7
      %s278 = smul.addr %s275, 8
      %s279 = sadd.s32 %s277, %s278
      %s280 = smul.addr %s279, 8
      %s281 = scalar_lea.vmem %s0, %s280
      %p282 = pneg %p54
      %p283 = pneg %p51
      %p284 = pneg %p75
      %p285 = pneg %p72
      %p286 = pneg %p96
      %p287 = pneg %p93
      %p288 = pneg %p117
      %p289 = pneg %p114
      %p290 = pneg %p138
      %p291 = pneg %p135
      %p292 = pneg %p166
      %p293 = pneg %p163
      %s294 = smul.u32 8, %s24
      %p295 = scmp.lt.s32.totalorder %s23, 1
      %s296 = scalar_select %p295, %s23, 1
      %p297 = scmp.lt.s32.totalorder %s294, 7
      %s298 = scalar_select %p297, %s294, 7
      %s299 = smul.addr %s296, 32
      %s300 = sadd.s32 %s298, %s299
      %s301 = smul.addr %s300, 4
      %s302 = scalar_lea.vmem %s5, %s301
      %p303 = pneg %p194
      %p304 = pneg %p191
      %s305 = smul.u32 8, %s24
      %p306 = scmp.lt.s32.totalorder %s23, 1
      %s307 = scalar_select %p306, %s23, 1
      %p308 = scmp.lt.s32.totalorder %s305, 7
      %s309 = scalar_select %p308, %s305, 7
      %s310 = smul.addr %s307, 32
      %s311 = sadd.s32 %s309, %s310
      %s312 = smul.addr %s311, 4
      %s313 = scalar_lea.vmem %s6, %s312
      %p314 = pneg %p222
      %p315 = pneg %p219
      %s316 = smul.u32 8, %s24
      %p317 = scmp.lt.s32.totalorder %s23, 1
      %s318 = scalar_select %p317, %s23, 1
      %p319 = scmp.lt.s32.totalorder %s316, 7
      %s320 = scalar_select %p319, %s316, 7
      %s321 = smul.addr %s318, 32
      %s322 = sadd.s32 %s320, %s321
      %s323 = smul.addr %s322, 4
      %s324 = scalar_lea.vmem %s7, %s323
      %s325 = smul.u32 8, %s24
      %p326 = scmp.lt.s32.totalorder %s23, 1
      %s327 = scalar_select %p326, %s23, 1
      %p328 = scmp.lt.s32.totalorder %s325, 7
      %s329 = scalar_select %p328, %s325, 7
      %s330 = smul.addr %s327, 8
      %s331 = sadd.s32 %s329, %s330
      %s332 = smul.addr %s331, 8
      %s333 = scalar_lea.vmem %s0, %s332
      %s334 = smul.u32 8, %s24
      %s335 = smul.u32 8, %s24
      %p336 = scmp.lt.s32.totalorder %s23, 1
      %s337 = scalar_select %p336, %s23, 1
      %p338 = scmp.lt.s32.totalorder %s335, 7
      %s339 = scalar_select %p338, %s335, 7
      %s340 = smul.addr %s337, 32
      %s341 = sadd.s32 %s339, %s340
      %s342 = smul.addr %s341, 4
      %s343 = scalar_lea.vmem %s5, %s342
      %s344 = smul.u32 8, %s24
      %s345 = smul.u32 8, %s24
      %p346 = scmp.lt.s32.totalorder %s23, 1
      %s347 = scalar_select %p346, %s23, 1
      %p348 = scmp.lt.s32.totalorder %s345, 7
      %s349 = scalar_select %p348, %s345, 7
      %s350 = smul.addr %s347, 32
      %s351 = sadd.s32 %s349, %s350
      %s352 = smul.addr %s351, 4
      %s353 = scalar_lea.vmem %s6, %s352
      %s354 = smul.u32 8, %s24
      %s355 = smul.u32 8, %s24
      %p356 = scmp.lt.s32.totalorder %s23, 1
      %s357 = scalar_select %p356, %s23, 1
      %p358 = scmp.lt.s32.totalorder %s355, 7
      %s359 = scalar_select %p358, %s355, 7
      %s360 = smul.addr %s357, 32
      %s361 = sadd.s32 %s359, %s360
      %s362 = smul.addr %s361, 4
      %s363 = scalar_lea.vmem %s7, %s362
      %s364 = smul.u32 8, %s24
      %v366 = vld [vmem:[%s333] sm:$0xff]
      %v367 = vld [vmem:[%s333 + $0x8] sm:$0xff]
      %v368 = vld [vmem:[%s333 + $0x10] sm:$0xff]
      %v369 = vld [vmem:[%s333 + $0x18] sm:$0xff]
      %v370 = vld [vmem:[%s333 + $0x20] sm:$0xff]
      %v371 = vld [vmem:[%s333 + $0x28] sm:$0xff]
      %v372 = vld [vmem:[%s333 + $0x30] sm:$0xff]
      %v373 = vld [vmem:[%s333 + $0x38] sm:$0xff]
      %vm374 = vcmask 261120
      %v375 = vsel %vm374, %v366, 0.0
      %376 = vadd.xlane.f32.xlu0 %v375
      %v377 = vpop.xlane.xlu0 %376
      %v378 = vsel %vm374, %v367, 0.0
      %379 = vadd.xlane.f32.xlu0 %v378
      %v380 = vpop.xlane.xlu0 %379
      %v381 = vsel %vm374, %v368, 0.0
      %382 = vadd.xlane.f32.xlu0 %v381
      %v383 = vpop.xlane.xlu0 %382
      %v384 = vsel %vm374, %v369, 0.0
      %385 = vadd.xlane.f32.xlu0 %v384
      %v386 = vpop.xlane.xlu0 %385
      %v387 = vsel %vm374, %v370, 0.0
      %388 = vadd.xlane.f32.xlu0 %v387
      %v389 = vpop.xlane.xlu0 %388
      %v390 = vsel %vm374, %v371, 0.0
      %391 = vadd.xlane.f32.xlu0 %v390
      %v392 = vpop.xlane.xlu0 %391
      %v393 = vsel %vm374, %v372, 0.0
      %394 = vadd.xlane.f32.xlu0 %v393
      %v395 = vpop.xlane.xlu0 %394
      %v396 = vsel %vm374, %v373, 0.0
      %397 = vadd.xlane.f32.xlu0 %v396
      %v398 = vpop.xlane.xlu0 %397
      %v399 = vrcp.pop 32.0
      %v400 = vmul.f32 %v377, %v399
      %v401 = vmul.f32 %v380, %v399
      %v402 = vmul.f32 %v383, %v399
      %v403 = vmul.f32 %v386, %v399
      %v404 = vmul.f32 %v389, %v399
      %v405 = vmul.f32 %v392, %v399
      %v406 = vmul.f32 %v395, %v399
      %v407 = vmul.f32 %v398, %v399
      %v408 = vsub.f32 %v366, %v400
      %v409 = vsub.f32 %v367, %v401
      %v410 = vsub.f32 %v368, %v402
      %v411 = vsub.f32 %v369, %v403
      %v412 = vsub.f32 %v370, %v404
      %v413 = vsub.f32 %v371, %v405
      %v414 = vsub.f32 %v372, %v406
      %v415 = vsub.f32 %v373, %v407
      %v416 = vmul.f32 %v408, %v408
      %v417 = vmul.f32 %v409, %v409
      %v418 = vmul.f32 %v410, %v410
      %v419 = vmul.f32 %v411, %v411
      %v420 = vmul.f32 %v412, %v412
      %v421 = vmul.f32 %v413, %v413
      %v422 = vmul.f32 %v414, %v414
      %v423 = vmul.f32 %v415, %v415
      %v424 = vsel %vm374, %v416, 0.0
      %425 = vadd.xlane.f32.xlu0 %v424
      %v426 = vpop.xlane.xlu0 %425
      %v427 = vsel %vm374, %v417, 0.0
      %428 = vadd.xlane.f32.xlu0 %v427
      %v429 = vpop.xlane.xlu0 %428
      %v430 = vsel %vm374, %v418, 0.0
      %431 = vadd.xlane.f32.xlu0 %v430
      %v432 = vpop.xlane.xlu0 %431
      %v433 = vsel %vm374, %v419, 0.0
      %434 = vadd.xlane.f32.xlu0 %v433
      %v435 = vpop.xlane.xlu0 %434
      %v436 = vsel %vm374, %v420, 0.0
      %437 = vadd.xlane.f32.xlu0 %v436
      %v438 = vpop.xlane.xlu0 %437
      %v439 = vsel %vm374, %v421, 0.0
      %440 = vadd.xlane.f32.xlu0 %v439
      %v441 = vpop.xlane.xlu0 %440
      %v442 = vsel %vm374, %v422, 0.0
      %443 = vadd.xlane.f32.xlu0 %v442
      %v444 = vpop.xlane.xlu0 %443
      %v445 = vsel %vm374, %v423, 0.0
      %446 = vadd.xlane.f32.xlu0 %v445
      %v447 = vpop.xlane.xlu0 %446
      %v448 = vmul.f32 %v426, %v399
      %v449 = vmul.f32 %v429, %v399
      %v450 = vmul.f32 %v432, %v399
      %v451 = vmul.f32 %v435, %v399
      %v452 = vmul.f32 %v438, %v399
      %v453 = vmul.f32 %v441, %v399
      %v454 = vmul.f32 %v444, %v399
      %v455 = vmul.f32 %v447, %v399
      %v456 = vadd.f32 %v448, 1e-05
      %v457 = vadd.f32 %v449, 1e-05
      %v458 = vadd.f32 %v450, 1e-05
      %v459 = vadd.f32 %v451, 1e-05
      %v460 = vadd.f32 %v452, 1e-05
      %v461 = vadd.f32 %v453, 1e-05
      %v462 = vadd.f32 %v454, 1e-05
      %v463 = vadd.f32 %v455, 1e-05
      %v464 = vrsqrt.pop %v456
      %v465 = vrsqrt.pop %v457
      %v466 = vrsqrt.pop %v458
      %v467 = vrsqrt.pop %v459
      %v468 = vrsqrt.pop %v460
      %v469 = vrsqrt.pop %v461
      %v470 = vrsqrt.pop %v462
      %v471 = vrsqrt.pop %v463
      %v472 = vmul.f32 %v408, %v464
      %v473 = vmul.f32 %v409, %v465
      %v474 = vmul.f32 %v410, %v466
      %v475 = vmul.f32 %v411, %v467
      %v476 = vmul.f32 %v412, %v468
      %v477 = vmul.f32 %v413, %v469
      %v478 = vmul.f32 %v414, %v470
      %v479 = vmul.f32 %v415, %v471
      %v480 = vld [vmem:[%s1] sm:$0x1]
      %v482 = vlaneseq
      %v483 = vshrl.u32 %v482, 7
      %v484 = vsub.s32 0, %v483
      %v485 = vrot.slane %v480, %v484
      %v487 = vmul.f32 %v472, %v485
      %v488 = vmul.f32 %v473, %v485
      %v489 = vmul.f32 %v474, %v485
      %v490 = vmul.f32 %v475, %v485
      %v491 = vmul.f32 %v476, %v485
      %v492 = vmul.f32 %v477, %v485
      %v493 = vmul.f32 %v478, %v485
      %v494 = vmul.f32 %v479, %v485
      %v495 = vld [vmem:[%s2] sm:$0x1]
      %v497 = vlaneseq
      %v498 = vshrl.u32 %v497, 7
      %v499 = vsub.s32 0, %v498
      %v500 = vrot.slane %v495, %v499
      %v502 = vadd.f32 %v487, %v500
      %v503 = vadd.f32 %v488, %v500
      %v504 = vadd.f32 %v489, %v500
      %v505 = vadd.f32 %v490, %v500
      %v506 = vadd.f32 %v491, %v500
      %v507 = vadd.f32 %v492, %v500
      %v508 = vadd.f32 %v493, %v500
      %v509 = vadd.f32 %v494, %v500
      %v510 = vpack.c.bf16 %v503, %v502
      %v511 = vpack.c.bf16 %v505, %v504
      %v512 = vpack.c.bf16 %v507, %v506
      %v513 = vpack.c.bf16 %v509, %v508
      %v514 = vld [vmem:[%s3] sm:$0xf]
      %v515 = vld [vmem:[%s3 + $0x4] sm:$0xf]
      %v516 = vld [vmem:[%s3 + $0x8] sm:$0xf]
      %v517 = vld [vmem:[%s3 + $0xc] sm:$0xf]
      %v518 = vld [vmem:[%s4] sm:$0x1]
      %v520 = vlaneseq
      %v521 = vshrl.u32 %v520, 7
      %v522 = vsub.s32 0, %v521
      %v523 = vrot.slane %v518, %v522
      %v529 = vunpack.c.l.b16 %v514
      %v530 = vunpack.c.l.b16 %v515
      %v531 = vunpack.c.l.b16 %v516
      %v532 = vunpack.c.l.b16 %v517
      %v533 = vpack.c.b16 %v530, %v529
      %v534 = vpack.c.b16 %v532, %v531
      %v538 = vsel %vm374, %v510, 0
      %v541 = vsel %vm374, %v511, 0
      %v544 = vsel %vm374, %v512, 0
      %v547 = vsel %vm374, %v513, 0
      %549 = vmatprep.subr.bf16.mxu0 0
      %550 = vmatpush1.bf16.msra.mxu0 %v533
      %551 = vmatprep.subr.bf16.mxu0 0
      %552 = vmatpush1.bf16.msra.mxu0 %v534
      %553 = vmatprep.subr.bf16.mxu0 0
      %554 = vmatpush1.bf16.msra.mxu0 0
      %555 = vmatprep.subr.bf16.mxu0 0
      %556 = vmatpush1.bf16.msra.mxu0 0
      %557 = vmatprep.subr.bf16.mxu0 0
      %558 = vmatpush1.bf16.msra.mxu0 0
      %559 = vmatprep.subr.bf16.mxu0 0
      %560 = vmatpush1.bf16.msra.mxu0 0
      %561 = vmatprep.subr.bf16.mxu0 0
      %562 = vmatpush1.bf16.msra.mxu0 0
      %563 = vmatprep.subr.bf16.mxu0 0
      %564 = vmatpush1.bf16.msra.mxu0 0
      %565 = vmatprep.subr.bf16.mxu0 0
      %566 = vmatpush1.bf16.msra.mxu0 0
      %567 = vmatprep.subr.bf16.mxu0 0
      %568 = vmatpush1.bf16.msra.mxu0 0
      %569 = vmatprep.subr.bf16.mxu0 0
      %570 = vmatpush1.bf16.msra.mxu0 0
      %571 = vmatprep.subr.bf16.mxu0 0
      %572 = vmatpush1.bf16.msra.mxu0 0
      %573 = vmatprep.subr.bf16.mxu0 0
      %574 = vmatpush1.bf16.msra.mxu0 0
      %575 = vmatprep.subr.bf16.mxu0 0
      %576 = vmatpush1.bf16.msra.mxu0 0
      %577 = vmatprep.subr.bf16.mxu0 0
      %578 = vmatpush1.bf16.msra.mxu0 0
      %579 = vmatprep.subr.bf16.mxu0 0
      %580 = vmatpush1.bf16.msra.mxu0 0
      %581 = vmatprep.mubr.bf16.mxu0 0
      %582 = vmatmul.mubr.bf16.gmra.mrb[0].mxu0 %v538
      %v583 = vpop.f32.mrb[0].mxu0
      %v584 = vadd.f32 %v523, %v583
      %v585 = vpop.f32.mrb[0].mxu0
      %v586 = vpop.f32.mrb[0].mxu0
      %v587 = vadd.f32 %v523, %v586
      %v588 = vpop.f32.mrb[0].mxu0
      %589 = vmatprep.mubr.bf16.mxu0 0
      %590 = vmatmul.mubr.bf16.gmra.mrb[0].mxu0 %v541
      %v591 = vpop.f32.mrb[0].mxu0
      %v592 = vadd.f32 %v523, %v591
      %v593 = vpop.f32.mrb[0].mxu0
      %v594 = vpop.f32.mrb[0].mxu0
      %v595 = vadd.f32 %v523, %v594
      %v596 = vpop.f32.mrb[0].mxu0
      %597 = vmatprep.mubr.bf16.mxu0 0
      %598 = vmatmul.mubr.bf16.gmra.mrb[0].mxu0 %v544
      %v599 = vpop.f32.mrb[0].mxu0
      %v600 = vadd.f32 %v523, %v599
      %v601 = vpop.f32.mrb[0].mxu0
      %v602 = vpop.f32.mrb[0].mxu0
      %v603 = vadd.f32 %v523, %v602
      %v604 = vpop.f32.mrb[0].mxu0
      %605 = vmatprep.mubr.bf16.mxu0 0
      %606 = vmatmul.mubr.bf16.gmra.mrb[0].mxu0 %v547
      %v607 = vpop.f32.mrb[0].mxu0
      %v608 = vadd.f32 %v523, %v607
      %v609 = vpop.f32.mrb[0].mxu0
      %v610 = vpop.f32.mrb[0].mxu0
      %v611 = vadd.f32 %v523, %v610
      %v612 = vpop.f32.mrb[0].mxu0
      %613 = vdwg.mxu0
      %v614 = vpack.c.bf16 %v587, %v584
      %v615 = vpack.c.bf16 %v595, %v592
      %v616 = vpack.c.bf16 %v603, %v600
      %v617 = vpack.c.bf16 %v611, %v608
      %v622 = vunpack.c.l.b16 %v614
      %v623 = vunpack.c.h.b16 %v614
      %v624 = vunpack.c.l.b16 %v615
      %v625 = vunpack.c.h.b16 %v615
      %v626 = vunpack.c.l.b16 %v616
      %v627 = vunpack.c.h.b16 %v616
      %v628 = vunpack.c.l.b16 %v617
      %v629 = vunpack.c.h.b16 %v617
      %v630 = vpack.c.b16 %v622, %v622
      %v631 = vpack.c.b16 %v623, %v623
      %v632 = vpack.c.b16 %v624, %v624
      %v633 = vpack.c.b16 %v625, %v625
      %v634 = vpack.c.b16 %v626, %v626
      %v635 = vpack.c.b16 %v627, %v627
      %v636 = vpack.c.b16 %v628, %v628
      %v637 = vpack.c.b16 %v629, %v629
      %vm646 = vcmask 60416
      %647 = vst.msk [vmem:[%s343] sm:$0xf] %vm646, %v630
      %648 = vst.msk [vmem:[%s343 + $0x4] sm:$0xf] %vm646, %v631
      %649 = vst.msk [vmem:[%s343 + $0x8] sm:$0xf] %vm646, %v632
      %650 = vst.msk [vmem:[%s343 + $0xc] sm:$0xf] %vm646, %v633
      %651 = vst.msk [vmem:[%s343 + $0x10] sm:$0xf] %vm646, %v634
      %652 = vst.msk [vmem:[%s343 + $0x14] sm:$0xf] %vm646, %v635
      %653 = vst.msk [vmem:[%s343 + $0x18] sm:$0xf] %vm646, %v636
      %654 = vst.msk [vmem:[%s343 + $0x1c] sm:$0xf] %vm646, %v637
      %655 = vrot.lane.b32.xlu0 %v630, 96
      %v656 = vpop.permute.xlu0 %655
      %657 = vrot.lane.b32.xlu0 %v631, 96
      %v658 = vpop.permute.xlu0 %657
      %659 = vrot.lane.b32.xlu0 %v632, 96
      %v660 = vpop.permute.xlu0 %659
      %661 = vrot.lane.b32.xlu0 %v633, 96
      %v662 = vpop.permute.xlu0 %661
      %663 = vrot.lane.b32.xlu0 %v634, 96
      %v664 = vpop.permute.xlu0 %663
      %665 = vrot.lane.b32.xlu0 %v635, 96
      %v666 = vpop.permute.xlu0 %665
      %667 = vrot.lane.b32.xlu0 %v636, 96
      %v668 = vpop.permute.xlu0 %667
      %669 = vrot.lane.b32.xlu0 %v637, 96
      %v670 = vpop.permute.xlu0 %669
      %679 = vst.msk [vmem:[%s353] sm:$0xf] %vm646, %v656
      %680 = vst.msk [vmem:[%s353 + $0x4] sm:$0xf] %vm646, %v658
      %681 = vst.msk [vmem:[%s353 + $0x8] sm:$0xf] %vm646, %v660
      %682 = vst.msk [vmem:[%s353 + $0xc] sm:$0xf] %vm646, %v662
      %683 = vst.msk [vmem:[%s353 + $0x10] sm:$0xf] %vm646, %v664
      %684 = vst.msk [vmem:[%s353 + $0x14] sm:$0xf] %vm646, %v666
      %685 = vst.msk [vmem:[%s353 + $0x18] sm:$0xf] %vm646, %v668
      %686 = vst.msk [vmem:[%s353 + $0x1c] sm:$0xf] %vm646, %v670
      %687 = vrot.lane.b32.xlu0 %v630, 64
      %v688 = vpop.permute.xlu0 %687
      %689 = vrot.lane.b32.xlu0 %v631, 64
      %v690 = vpop.permute.xlu0 %689
      %691 = vrot.lane.b32.xlu0 %v632, 64
      %v692 = vpop.permute.xlu0 %691
      %693 = vrot.lane.b32.xlu0 %v633, 64
      %v694 = vpop.permute.xlu0 %693
      %695 = vrot.lane.b32.xlu0 %v634, 64
      %v696 = vpop.permute.xlu0 %695
      %697 = vrot.lane.b32.xlu0 %v635, 64
      %v698 = vpop.permute.xlu0 %697
      %699 = vrot.lane.b32.xlu0 %v636, 64
      %v700 = vpop.permute.xlu0 %699
      %701 = vrot.lane.b32.xlu0 %v637, 64
      %v702 = vpop.permute.xlu0 %701
      %711 = vst.msk [vmem:[%s363] sm:$0xf] %vm646, %v688
      %712 = vst.msk [vmem:[%s363 + $0x4] sm:$0xf] %vm646, %v690
      %713 = vst.msk [vmem:[%s363 + $0x8] sm:$0xf] %vm646, %v692
      %714 = vst.msk [vmem:[%s363 + $0xc] sm:$0xf] %vm646, %v694
      %715 = vst.msk [vmem:[%s363 + $0x10] sm:$0xf] %vm646, %v696
      %716 = vst.msk [vmem:[%s363 + $0x14] sm:$0xf] %vm646, %v698
      %717 = vst.msk [vmem:[%s363 + $0x18] sm:$0xf] %vm646, %v700
      %718 = vst.msk [vmem:[%s363 + $0x1c] sm:$0xf] %vm646, %v702
      %719 = vrot.lane.b32.xlu0 %v630, 120
      %v720 = vpop.permute.xlu0 %719
      %721 = vrot.lane.b32.xlu0 %v631, 120
      %v722 = vpop.permute.xlu0 %721
      %723 = vrot.lane.b32.xlu0 %v632, 120
      %v724 = vpop.permute.xlu0 %723
      %725 = vrot.lane.b32.xlu0 %v633, 120
      %v726 = vpop.permute.xlu0 %725
      %727 = vrot.lane.b32.xlu0 %v634, 120
      %v728 = vpop.permute.xlu0 %727
      %729 = vrot.lane.b32.xlu0 %v635, 120
      %v730 = vpop.permute.xlu0 %729
      %731 = vrot.lane.b32.xlu0 %v636, 120
      %v732 = vpop.permute.xlu0 %731
      %733 = vrot.lane.b32.xlu0 %v637, 120
      %v734 = vpop.permute.xlu0 %733
      %s743 = scalar_lea.vmem %s343, 32
      %744 = vst.msk [vmem:[%s743] sm:$0xf] %vm646, %v720
      %745 = vst.msk [vmem:[%s743 + $0x4] sm:$0xf] %vm646, %v722
      %746 = vst.msk [vmem:[%s743 + $0x8] sm:$0xf] %vm646, %v724
      %747 = vst.msk [vmem:[%s743 + $0xc] sm:$0xf] %vm646, %v726
      %748 = vst.msk [vmem:[%s743 + $0x10] sm:$0xf] %vm646, %v728
      %749 = vst.msk [vmem:[%s743 + $0x14] sm:$0xf] %vm646, %v730
      %750 = vst.msk [vmem:[%s743 + $0x18] sm:$0xf] %vm646, %v732
      %751 = vst.msk [vmem:[%s743 + $0x1c] sm:$0xf] %vm646, %v734
      %752 = vrot.lane.b32.xlu0 %v630, 88
      %v753 = vpop.permute.xlu0 %752
      %754 = vrot.lane.b32.xlu0 %v631, 88
      %v755 = vpop.permute.xlu0 %754
      %756 = vrot.lane.b32.xlu0 %v632, 88
      %v757 = vpop.permute.xlu0 %756
      %758 = vrot.lane.b32.xlu0 %v633, 88
      %v759 = vpop.permute.xlu0 %758
      %760 = vrot.lane.b32.xlu0 %v634, 88
      %v761 = vpop.permute.xlu0 %760
      %762 = vrot.lane.b32.xlu0 %v635, 88
      %v763 = vpop.permute.xlu0 %762
      %764 = vrot.lane.b32.xlu0 %v636, 88
      %v765 = vpop.permute.xlu0 %764
      %766 = vrot.lane.b32.xlu0 %v637, 88
      %v767 = vpop.permute.xlu0 %766
      %s776 = scalar_lea.vmem %s353, 32
      %777 = vst.msk [vmem:[%s776] sm:$0xf] %vm646, %v753
      %778 = vst.msk [vmem:[%s776 + $0x4] sm:$0xf] %vm646, %v755
      %779 = vst.msk [vmem:[%s776 + $0x8] sm:$0xf] %vm646, %v757
      %780 = vst.msk [vmem:[%s776 + $0xc] sm:$0xf] %vm646, %v759
      %781 = vst.msk [vmem:[%s776 + $0x10] sm:$0xf] %vm646, %v761
      %782 = vst.msk [vmem:[%s776 + $0x14] sm:$0xf] %vm646, %v763
      %783 = vst.msk [vmem:[%s776 + $0x18] sm:$0xf] %vm646, %v765
      %784 = vst.msk [vmem:[%s776 + $0x1c] sm:$0xf] %vm646, %v767
      %785 = vrot.lane.b32.xlu0 %v630, 56
      %v786 = vpop.permute.xlu0 %785
      %787 = vrot.lane.b32.xlu0 %v631, 56
      %v788 = vpop.permute.xlu0 %787
      %789 = vrot.lane.b32.xlu0 %v632, 56
      %v790 = vpop.permute.xlu0 %789
      %791 = vrot.lane.b32.xlu0 %v633, 56
      %v792 = vpop.permute.xlu0 %791
      %793 = vrot.lane.b32.xlu0 %v634, 56
      %v794 = vpop.permute.xlu0 %793
      %795 = vrot.lane.b32.xlu0 %v635, 56
      %v796 = vpop.permute.xlu0 %795
      %797 = vrot.lane.b32.xlu0 %v636, 56
      %v798 = vpop.permute.xlu0 %797
      %799 = vrot.lane.b32.xlu0 %v637, 56
      %v800 = vpop.permute.xlu0 %799
      %s809 = scalar_lea.vmem %s363, 32
      %810 = vst.msk [vmem:[%s809] sm:$0xf] %vm646, %v786
      %811 = vst.msk [vmem:[%s809 + $0x4] sm:$0xf] %vm646, %v788
      %812 = vst.msk [vmem:[%s809 + $0x8] sm:$0xf] %vm646, %v790
      %813 = vst.msk [vmem:[%s809 + $0xc] sm:$0xf] %vm646, %v792
      %814 = vst.msk [vmem:[%s809 + $0x10] sm:$0xf] %vm646, %v794
      %815 = vst.msk [vmem:[%s809 + $0x14] sm:$0xf] %vm646, %v796
      %816 = vst.msk [vmem:[%s809 + $0x18] sm:$0xf] %vm646, %v798
      %817 = vst.msk [vmem:[%s809 + $0x1c] sm:$0xf] %vm646, %v800
      %818 = vrot.lane.b32.xlu0 %v630, 112
      %v819 = vpop.permute.xlu0 %818
      %820 = vrot.lane.b32.xlu0 %v631, 112
      %v821 = vpop.permute.xlu0 %820
      %822 = vrot.lane.b32.xlu0 %v632, 112
      %v823 = vpop.permute.xlu0 %822
      %824 = vrot.lane.b32.xlu0 %v633, 112
      %v825 = vpop.permute.xlu0 %824
      %826 = vrot.lane.b32.xlu0 %v634, 112
      %v827 = vpop.permute.xlu0 %826
      %828 = vrot.lane.b32.xlu0 %v635, 112
      %v829 = vpop.permute.xlu0 %828
      %830 = vrot.lane.b32.xlu0 %v636, 112
      %v831 = vpop.permute.xlu0 %830
      %832 = vrot.lane.b32.xlu0 %v637, 112
      %v833 = vpop.permute.xlu0 %832
      %s842 = scalar_lea.vmem %s343, 64
      %843 = vst.msk [vmem:[%s842] sm:$0xf] %vm646, %v819
      %844 = vst.msk [vmem:[%s842 + $0x4] sm:$0xf] %vm646, %v821
      %845 = vst.msk [vmem:[%s842 + $0x8] sm:$0xf] %vm646, %v823
      %846 = vst.msk [vmem:[%s842 + $0xc] sm:$0xf] %vm646, %v825
      %847 = vst.msk [vmem:[%s842 + $0x10] sm:$0xf] %vm646, %v827
      %848 = vst.msk [vmem:[%s842 + $0x14] sm:$0xf] %vm646, %v829
      %849 = vst.msk [vmem:[%s842 + $0x18] sm:$0xf] %vm646, %v831
      %850 = vst.msk [vmem:[%s842 + $0x1c] sm:$0xf] %vm646, %v833
      %851 = vrot.lane.b32.xlu0 %v630, 80
      %v852 = vpop.permute.xlu0 %851
      %853 = vrot.lane.b32.xlu0 %v631, 80
      %v854 = vpop.permute.xlu0 %853
      %855 = vrot.lane.b32.xlu0 %v632, 80
      %v856 = vpop.permute.xlu0 %855
      %857 = vrot.lane.b32.xlu0 %v633, 80
      %v858 = vpop.permute.xlu0 %857
      %859 = vrot.lane.b32.xlu0 %v634, 80
      %v860 = vpop.permute.xlu0 %859
      %861 = vrot.lane.b32.xlu0 %v635, 80
      %v862 = vpop.permute.xlu0 %861
      %863 = vrot.lane.b32.xlu0 %v636, 80
      %v864 = vpop.permute.xlu0 %863
      %865 = vrot.lane.b32.xlu0 %v637, 80
      %v866 = vpop.permute.xlu0 %865
      %s875 = scalar_lea.vmem %s353, 64
      %876 = vst.msk [vmem:[%s875] sm:$0xf] %vm646, %v852
      %877 = vst.msk [vmem:[%s875 + $0x4] sm:$0xf] %vm646, %v854
      %878 = vst.msk [vmem:[%s875 + $0x8] sm:$0xf] %vm646, %v856
      %879 = vst.msk [vmem:[%s875 + $0xc] sm:$0xf] %vm646, %v858
      %880 = vst.msk [vmem:[%s875 + $0x10] sm:$0xf] %vm646, %v860
      %881 = vst.msk [vmem:[%s875 + $0x14] sm:$0xf] %vm646, %v862
      %882 = vst.msk [vmem:[%s875 + $0x18] sm:$0xf] %vm646, %v864
      %883 = vst.msk [vmem:[%s875 + $0x1c] sm:$0xf] %vm646, %v866
      %884 = vrot.lane.b32.xlu0 %v630, 48
      %v885 = vpop.permute.xlu0 %884
      %886 = vrot.lane.b32.xlu0 %v631, 48
      %v887 = vpop.permute.xlu0 %886
      %888 = vrot.lane.b32.xlu0 %v632, 48
      %v889 = vpop.permute.xlu0 %888
      %890 = vrot.lane.b32.xlu0 %v633, 48
      %v891 = vpop.permute.xlu0 %890
      %892 = vrot.lane.b32.xlu0 %v634, 48
      %v893 = vpop.permute.xlu0 %892
      %894 = vrot.lane.b32.xlu0 %v635, 48
      %v895 = vpop.permute.xlu0 %894
      %896 = vrot.lane.b32.xlu0 %v636, 48
      %v897 = vpop.permute.xlu0 %896
      %898 = vrot.lane.b32.xlu0 %v637, 48
      %v899 = vpop.permute.xlu0 %898
      %s908 = scalar_lea.vmem %s363, 64
      %909 = vst.msk [vmem:[%s908] sm:$0xf] %vm646, %v885
      %910 = vst.msk [vmem:[%s908 + $0x4] sm:$0xf] %vm646, %v887
      %911 = vst.msk [vmem:[%s908 + $0x8] sm:$0xf] %vm646, %v889
      %912 = vst.msk [vmem:[%s908 + $0xc] sm:$0xf] %vm646, %v891
      %913 = vst.msk [vmem:[%s908 + $0x10] sm:$0xf] %vm646, %v893
      %914 = vst.msk [vmem:[%s908 + $0x14] sm:$0xf] %vm646, %v895
      %915 = vst.msk [vmem:[%s908 + $0x18] sm:$0xf] %vm646, %v897
      %916 = vst.msk [vmem:[%s908 + $0x1c] sm:$0xf] %vm646, %v899
      %917 = vrot.lane.b32.xlu0 %v630, 104
      %v918 = vpop.permute.xlu0 %917
      %919 = vrot.lane.b32.xlu0 %v631, 104
      %v920 = vpop.permute.xlu0 %919
      %921 = vrot.lane.b32.xlu0 %v632, 104
      %v922 = vpop.permute.xlu0 %921
      %923 = vrot.lane.b32.xlu0 %v633, 104
      %v924 = vpop.permute.xlu0 %923
      %925 = vrot.lane.b32.xlu0 %v634, 104
      %v926 = vpop.permute.xlu0 %925
      %927 = vrot.lane.b32.xlu0 %v635, 104
      %v928 = vpop.permute.xlu0 %927
      %929 = vrot.lane.b32.xlu0 %v636, 104
      %v930 = vpop.permute.xlu0 %929
      %931 = vrot.lane.b32.xlu0 %v637, 104
      %v932 = vpop.permute.xlu0 %931
      %s941 = scalar_lea.vmem %s343, 96
      %942 = vst.msk [vmem:[%s941] sm:$0xf] %vm646, %v918
      %943 = vst.msk [vmem:[%s941 + $0x4] sm:$0xf] %vm646, %v920
      %944 = vst.msk [vmem:[%s941 + $0x8] sm:$0xf] %vm646, %v922
      %945 = vst.msk [vmem:[%s941 + $0xc] sm:$0xf] %vm646, %v924
      %946 = vst.msk [vmem:[%s941 + $0x10] sm:$0xf] %vm646, %v926
      %947 = vst.msk [vmem:[%s941 + $0x14] sm:$0xf] %vm646, %v928
      %948 = vst.msk [vmem:[%s941 + $0x18] sm:$0xf] %vm646, %v930
      %949 = vst.msk [vmem:[%s941 + $0x1c] sm:$0xf] %vm646, %v932
      %950 = vrot.lane.b32.xlu0 %v630, 72
      %v951 = vpop.permute.xlu0 %950
      %952 = vrot.lane.b32.xlu0 %v631, 72
      %v953 = vpop.permute.xlu0 %952
      %954 = vrot.lane.b32.xlu0 %v632, 72
      %v955 = vpop.permute.xlu0 %954
      %956 = vrot.lane.b32.xlu0 %v633, 72
      %v957 = vpop.permute.xlu0 %956
      %958 = vrot.lane.b32.xlu0 %v634, 72
      %v959 = vpop.permute.xlu0 %958
      %960 = vrot.lane.b32.xlu0 %v635, 72
      %v961 = vpop.permute.xlu0 %960
      %962 = vrot.lane.b32.xlu0 %v636, 72
      %v963 = vpop.permute.xlu0 %962
      %964 = vrot.lane.b32.xlu0 %v637, 72
      %v965 = vpop.permute.xlu0 %964
      %s974 = scalar_lea.vmem %s353, 96
      %975 = vst.msk [vmem:[%s974] sm:$0xf] %vm646, %v951
      %976 = vst.msk [vmem:[%s974 + $0x4] sm:$0xf] %vm646, %v953
      %977 = vst.msk [vmem:[%s974 + $0x8] sm:$0xf] %vm646, %v955
      %978 = vst.msk [vmem:[%s974 + $0xc] sm:$0xf] %vm646, %v957
      %979 = vst.msk [vmem:[%s974 + $0x10] sm:$0xf] %vm646, %v959
      %980 = vst.msk [vmem:[%s974 + $0x14] sm:$0xf] %vm646, %v961
      %981 = vst.msk [vmem:[%s974 + $0x18] sm:$0xf] %vm646, %v963
      %982 = vst.msk [vmem:[%s974 + $0x1c] sm:$0xf] %vm646, %v965
      %983 = vrot.lane.b32.xlu0 %v630, 40
      %v984 = vpop.permute.xlu0 %983
      %985 = vrot.lane.b32.xlu0 %v631, 40
      %v986 = vpop.permute.xlu0 %985
      %987 = vrot.lane.b32.xlu0 %v632, 40
      %v988 = vpop.permute.xlu0 %987
      %989 = vrot.lane.b32.xlu0 %v633, 40
      %v990 = vpop.permute.xlu0 %989
      %991 = vrot.lane.b32.xlu0 %v634, 40
      %v992 = vpop.permute.xlu0 %991
      %993 = vrot.lane.b32.xlu0 %v635, 40
      %v994 = vpop.permute.xlu0 %993
      %995 = vrot.lane.b32.xlu0 %v636, 40
      %v996 = vpop.permute.xlu0 %995
      %997 = vrot.lane.b32.xlu0 %v637, 40
      %v998 = vpop.permute.xlu0 %997
      %s1007 = scalar_lea.vmem %s363, 96
      %1008 = vst.msk [vmem:[%s1007] sm:$0xf] %vm646, %v984
      %1009 = vst.msk [vmem:[%s1007 + $0x4] sm:$0xf] %vm646, %v986
      %1010 = vst.msk [vmem:[%s1007 + $0x8] sm:$0xf] %vm646, %v988
      %1011 = vst.msk [vmem:[%s1007 + $0xc] sm:$0xf] %vm646, %v990
      %1012 = vst.msk [vmem:[%s1007 + $0x10] sm:$0xf] %vm646, %v992
      %1013 = vst.msk [vmem:[%s1007 + $0x14] sm:$0xf] %vm646, %v994
      %1014 = vst.msk [vmem:[%s1007 + $0x18] sm:$0xf] %vm646, %v996
      %1015 = vst.msk [vmem:[%s1007 + $0x1c] sm:$0xf] %vm646, %v998
      %s1016 = smul.u32 8, %s24
      %p1017 = scmp.lt.s32.totalorder %s23, 1
      %s1018 = scalar_select %p1017, %s23, 1
      %p1019 = scmp.lt.s32.totalorder %s1016, 7
      %s1020 = scalar_select %p1019, %s1016, 7
      %s1021 = smul.addr %s1018, 32
      %s1022 = sadd.s32 %s1020, %s1021
      %s1023 = smul.addr %s1022, 4
      %s1024 = scalar_lea.vmem %s5, %s1023
      %s1025 = smul.u32 8, %s24
      %p1026 = scmp.lt.s32.totalorder %s23, 1
      %s1027 = scalar_select %p1026, %s23, 1
      %p1028 = scmp.lt.s32.totalorder %s1025, 7
      %s1029 = scalar_select %p1028, %s1025, 7
      %s1030 = smul.addr %s1027, 32
      %s1031 = sadd.s32 %s1029, %s1030
      %s1032 = smul.addr %s1031, 4
      %s1033 = scalar_lea.vmem %s6, %s1032
      %s1034 = smul.u32 8, %s24
      %p1035 = scmp.lt.s32.totalorder %s23, 1
      %s1036 = scalar_select %p1035, %s23, 1
      %p1037 = scmp.lt.s32.totalorder %s1034, 7
      %s1038 = scalar_select %p1037, %s1034, 7
      %s1039 = smul.addr %s1036, 32
      %s1040 = sadd.s32 %s1038, %s1039
      %s1041 = smul.addr %s1040, 4
      %s1042 = scalar_lea.vmem %s7, %s1041
      // Predicated region
      $region41: #{tpu_custom_call.1} parent=39 // pred_check
        %p1043 = pneg %p163
      $region42: #{tpu_custom_call.1} parent=39 // pred_check_branch
        %1045 = sbr.rel (%p1043) target = $region44
      $region43: #{tpu_custom_call.1} parent=39 // pred_region
        %s1046 = smul.u32 8, %s24
      $region44: #{tpu_custom_call.1} parent=39 // pred_fallthru
        _
      // Predicated region
      $region45: #{tpu_custom_call.1} parent=39 // pred_check
        %p1047 = pneg %p191
      $region46: #{tpu_custom_call.1} parent=39 // pred_check_branch
        %1049 = sbr.rel (%p1047) target = $region48
      $region47: #{tpu_custom_call.1} parent=39 // pred_region
        %s1050 = smul.u32 8, %s24
      $region48: #{tpu_custom_call.1} parent=39 // pred_fallthru
        _
      // Predicated region
      $region49: #{tpu_custom_call.1} parent=39 // pred_check
        %p1051 = pneg %p219
      $region50: #{tpu_custom_call.1} parent=39 // pred_check_branch
        %1053 = sbr.rel (%p1051) target = $region52
      $region51: #{tpu_custom_call.1} parent=39 // pred_region
        %s1054 = smul.u32 8, %s24
      $region52: #{tpu_custom_call.1} parent=39 // pred_fallthru
        _
    $region40: #{tpu_custom_call.1} parent=5 // pred_fallthru
      _
    %p1055 = scmp.le.s32.totalorder 2, %s14
    // Predicated region
    $region53: #{tpu_custom_call.1} parent=5 // pred_check
      %p1056 = pneg %p1055
    $region54: #{tpu_custom_call.1} parent=5 // pred_check_branch
      %1058 = sbr.rel (%p1056) target = $region56
    $region55: #{tpu_custom_call.1} parent=5 // pred_region
      %s1059 = ssub.s32 %s14, 2
      // Predicated region
      $region57: #{tpu_custom_call.1} parent=55 // pred_check
        %p1060 = pneg %p169
      $region58: #{tpu_custom_call.1} parent=55 // pred_check_branch
        %1062 = sbr.rel (%p1060) target = $region60
      $region59: #{tpu_custom_call.1} parent=55 // pred_region
        %s1063 = smul.u32 8, %s26
        %p1064 = scmp.lt.s32.totalorder %s25, 1
        %s1065 = scalar_select %p1064, %s25, 1
        %p1066 = scmp.lt.s32.totalorder %s1063, 7
        %s1067 = scalar_select %p1066, %s1063, 7
        %s1068 = smul.addr %s1065, 32
        %s1069 = sadd.s32 %s1067, %s1068
        %s1070 = smul.addr %s1069, 4
        %s1071 = scalar_lea.vmem %s5, %s1070
      $region60: #{tpu_custom_call.1} parent=55 // pred_fallthru
        _
      // Predicated region
      $region61: #{tpu_custom_call.1} parent=55 // pred_check
        %p1072 = pneg %p197
      $region62: #{tpu_custom_call.1} parent=55 // pred_check_branch
        %1074 = sbr.rel (%p1072) target = $region64
      $region63: #{tpu_custom_call.1} parent=55 // pred_region
        %s1075 = smul.u32 8, %s26
        %p1076 = scmp.lt.s32.totalorder %s25, 1
        %s1077 = scalar_select %p1076, %s25, 1
        %p1078 = scmp.lt.s32.totalorder %s1075, 7
        %s1079 = scalar_select %p1078, %s1075, 7
        %s1080 = smul.addr %s1077, 32
        %s1081 = sadd.s32 %s1079, %s1080
        %s1082 = smul.addr %s1081, 4
        %s1083 = scalar_lea.vmem %s6, %s1082
      $region64: #{tpu_custom_call.1} parent=55 // pred_fallthru
        _
      // Predicated region
      $region65: #{tpu_custom_call.1} parent=55 // pred_check
        %p1084 = pneg %p225
      $region66: #{tpu_custom_call.1} parent=55 // pred_check_branch
        %1086 = sbr.rel (%p1084) target = $region68
      $region67: #{tpu_custom_call.1} parent=55 // pred_region
        %s1087 = smul.u32 8, %s26
        %p1088 = scmp.lt.s32.totalorder %s25, 1
        %s1089 = scalar_select %p1088, %s25, 1
        %p1090 = scmp.lt.s32.totalorder %s1087, 7
        %s1091 = scalar_select %p1090, %s1087, 7
        %s1092 = smul.addr %s1089, 32
        %s1093 = sadd.s32 %s1091, %s1092
        %s1094 = smul.addr %s1093, 4
        %s1095 = scalar_lea.vmem %s7, %s1094
      $region68: #{tpu_custom_call.1} parent=55 // pred_fallthru
        _
    $region56: #{tpu_custom_call.1} parent=5 // pred_fallthru
      _
  $region6: #{tpu_custom_call.1} parent=0 // loop_footer
    %s18 = sadd.s32 1, %s14
  $region7: #{tpu_custom_call.1} parent=0 // loop_footer_branch
    %13 = sbr.rel target = $region3
  $region8: #{tpu_custom_call.1} parent=0 // loop_exit
    _

</llo_original>
